<compile_context>
chip_gen: v6e
topology: v6e:2x2x1
jax: 0.10.0
libtpu: 0.0.40
codegen_flags: <defaults>
</compile_context>

<pallas_src>
from functools import partial

import jax
import jax.numpy as jnp
from jax.experimental import pallas as pl
from jax.experimental.pallas import tpu as pltpu


def _round_up(x, m):
    return ((x + m - 1) // m) * m


# Row-tile upper bound: multiple of 256 (v6e/v7x MXU rows; also a multiple of
# 128 for v5e).  Bigger tiles amortize the ~0.35 us per-grid-step overhead.
_TM_MAX = 512


def _pick_tm(n):
    """Row tile: full-dim block for small batches (no row padding needed),
    otherwise a multiple of 256 chosen so the grid has >= 2 steps (v7x has two
    TensorCores; rows are independent -> 'parallel' grid axis)."""
    if n <= 256:
        return n
    return min(_TM_MAX, _round_up(pl.cdiv(n, 2), 256))


def _make_mlp_kernel(n_branches):
    # For each branch b:  o_b = relu(x_b @ W1 + b1) @ W2 + b2
    #   x: (tm, D_in) f32   -> cast to bf16 in-kernel (VPU; free under MXU/DMA)
    #   W1: (D_in, H) bf16, b1: (1, H) f32
    #   W2: (H, D_out_pad) bf16, b2: (1, D_out_pad) f32
    #   o: (tm, D_out_pad) f32  (lane-dense, D_out_pad = 128-multiple)
    def kernel(*refs):
        x_refs = refs[:n_branches]
        w1_ref, b1_ref, w2_ref, b2_ref = refs[n_branches:n_branches + 4]
        o_refs = refs[n_branches + 4:]
        w1 = w1_ref[...]
        b1 = b1_ref[...]
        w2 = w2_ref[...]
        b2 = b2_ref[...]
        for x_ref, o_ref in zip(x_refs, o_refs):       # unrolled at trace time
            x = x_ref[...].astype(jnp.bfloat16)        # in-kernel f32->bf16 cast
            h = jnp.dot(x, w1, preferred_element_type=jnp.float32)
            h = jnp.maximum(h + b1, 0.0)               # bias add + ReLU in f32
            out = jnp.dot(h.astype(jnp.bfloat16), w2,
                          preferred_element_type=jnp.float32)
            o_ref[...] = out + b2
    return kernel


def _mlp_pallas(xs, w1, b1, w2, b2):
    """xs: list of (N, D_in) f32 arrays (1 branch for eval, 3 for training).
    Returns a tuple of (N, D_out_pad) f32 arrays (same order as xs)."""
    n_branches = len(xs)
    n, d_in = xs[0].shape
    hidden = w1.shape[1]
    d_out_pad = w2.shape[1]

    tm = _pick_tm(n)
    # Uneven last block (n % tm != 0) is handled by Pallas edge masking; no
    # host-side jnp.pad pass over the inputs.
    grid = (pl.cdiv(n, tm),)

    row_in_specs = [pl.BlockSpec((tm, d_in), lambda i: (i, 0))
                    for _ in range(n_branches)]
    # Weights/biases stay resident across the row grid (constant index_map);
    # at these sizes (~0.3 MiB) the default double-buffering cost is negligible.
    weight_specs = [
        pl.BlockSpec((d_in, hidden), lambda i: (0, 0)),        # W1
        pl.BlockSpec((1, hidden), lambda i: (0, 0)),           # b1
        pl.BlockSpec((hidden, d_out_pad), lambda i: (0, 0)),   # W2
        pl.BlockSpec((1, d_out_pad), lambda i: (0, 0)),        # b2
    ]
    out_specs = [pl.BlockSpec((tm, d_out_pad), lambda i: (i, 0))
                 for _ in range(n_branches)]
    out_shape = [jax.ShapeDtypeStruct((n, d_out_pad), jnp.float32)
                 for _ in range(n_branches)]

    outs = pl.pallas_call(
        _make_mlp_kernel(n_branches),
        out_shape=out_shape,
        grid_spec=pltpu.PrefetchScalarGridSpec(
            num_scalar_prefetch=0,
            grid=grid,
            in_specs=row_in_specs + weight_specs,
            out_specs=out_specs,
        ),
        compiler_params=pltpu.CompilerParams(
            dimension_semantics=("parallel",),   # rows independent -> megacore / 2 TCs
            # ~15 MiB needed at tm=512 with 3 f32 input tiles double-buffered;
            # 48 MiB leaves headroom and stays under v7x's 64 MiB physical VMEM.
            vmem_limit_bytes=48 * 1024 * 1024,
        ),
    )(*xs, w1, b1, w2, b2)
    if not isinstance(outs, (list, tuple)):
        outs = (outs,)
    return tuple(outs)


@partial(jax.jit, static_argnames=("d_out",))
def _triplet_apply(x0, x1, x2, w1, b1, w2, b2, *, d_out):
    b = x0.shape[0]
    xs = [x.reshape(b, -1).astype(jnp.float32) for x in (x0, x1, x2)]
    o0, o1, o2 = _mlp_pallas(xs, w1, b1, w2, b2)
    return o0[:, :d_out], o1[:, :d_out], o2[:, :d_out]


@partial(jax.jit, static_argnames=("d_out",))
def _single_apply(x, w1, b1, w2, b2, *, d_out):
    n = x.shape[0]
    (o,) = _mlp_pallas([x.reshape(n, -1).astype(jnp.float32)], w1, b1, w2, b2)
    return o[:, :d_out]


# ----------------------------------------------------------------------------
# TripletNet forward (mirrors the PyTorch module semantics)
# ----------------------------------------------------------------------------
class TripletNet:
    def __init__(self, params):
        w1, b1, w2, b2 = params
        self.d_out = w2.shape[1]
        d_out_pad = _round_up(self.d_out, 128)

        # Lane-dense output: zero-pad second layer to a 128-wide output so the
        # kernel issues unmasked stores; wrapper slices back to d_out.
        w2p = jnp.pad(w2, ((0, 0), (0, d_out_pad - self.d_out)))
        b2p = jnp.pad(b2, ((0, 0), (0, d_out_pad - self.d_out)))

        # Cast matmul weights to bf16 once; keep biases in f32.
        self.w1 = w1.astype(jnp.bfloat16)
        self.b1 = b1.astype(jnp.float32)
        self.w2 = w2p.astype(jnp.bfloat16)
        self.b2 = b2p.astype(jnp.float32)
        self.training = True

    def forward(self, data):
        if self.training:
            x0, x1, x2 = data
            # One pallas_call for all three branches: weights DMA'd once, no
            # HBM concat/pad/cast passes on the inputs.
            anchor, positive, negative = _triplet_apply(
                x0, x1, x2, self.w1, self.b1, self.w2, self.b2, d_out=self.d_out)
            return (anchor, positive, negative)
        else:
            x = data
            return _single_apply(x, self.w1, self.b1, self.w2, self.b2,
                                 d_out=self.d_out)

    __call__ = forward


# ----------------------------------------------------------------------------
# Deterministic parameter init (synthetic; no checkpoint load)
# ----------------------------------------------------------------------------
def init_params(key, d_in, hidden, d_out):
    k1, k2, k3, k4 = jax.random.split(key, 4)
    w1 = jax.random.normal(k1, (d_in, hidden), jnp.float32) * (1.0 / jnp.sqrt(d_in))
    b1 = jax.random.normal(k2, (1, hidden), jnp.float32) * 0.01
    w2 = jax.random.normal(k3, (hidden, d_out), jnp.float32) * (1.0 / jnp.sqrt(hidden))
    b2 = jax.random.normal(k4, (1, d_out), jnp.float32) * 0.01
    return (w1, b1, w2, b2)


if __name__ == "__main__":
    key = jax.random.PRNGKey(0)

    # Small shapes: NCHW inputs (batch=2, channels=4, 16x16), hidden=128, embed=32
    B, C, H, W = 2, 4, 16, 16
    D_IN = C * H * W
    HIDDEN = 128
    D_OUT = 32

    kp, kx0, kx1, kx2, kxb = jax.random.split(key, 5)
    params = init_params(kp, D_IN, HIDDEN, D_OUT)

    x0 = jax.random.normal(kx0, (B, C, H, W), jnp.float32)
    x1 = jax.random.normal(kx1, (B, C, H, W), jnp.float32)
    x2 = jax.random.normal(kx2, (B, C, H, W), jnp.float32)

    net = TripletNet(params)

    # Training mode: three branches with shared weights, one fused pallas_call.
    net.training = True
    anchor, positive, negative = net((x0, x1, x2))
    jax.block_until_ready((anchor, positive, negative))
    assert anchor.shape == (B, D_OUT)
    assert positive.shape == (B, D_OUT)
    assert negative.shape == (B, D_OUT)

    # Eval mode: single branch, tiny batch (full-dim row block, grid=1).
    net.training = False
    y = net(x0)
    jax.block_until_ready(y)
    assert y.shape == (B, D_OUT)

    # Eval mode: larger batch exercising the multi-step grid (tm=256, grid=2)
    # and the Pallas-masked partial edge block (300 % 256 != 0).
    NB = 300
    xb = jax.random.normal(kxb, (NB, C, H, W), jnp.float32)
    yb = net(xb)
    jax.block_until_ready(yb)
    assert yb.shape == (NB, D_OUT)

    # --- Correctness checks -------------------------------------------------
    w1_f, b1_f, w2_f, b2_f = params

    def ref_net_bf16(x):
        # Same bf16-operand / f32-accumulate path as the kernel.
        xf = x.reshape(x.shape[0], -1)
        h = jnp.dot(xf.astype(jnp.bfloat16), w1_f.astype(jnp.bfloat16),
                    preferred_element_type=jnp.float32) + b1_f
        h = jnp.maximum(h, 0.0)
        return jnp.dot(h.astype(jnp.bfloat16), w2_f.astype(jnp.bfloat16),
                       preferred_element_type=jnp.float32) + b2_f

    def ref_net_f32(x):
        xf = x.reshape(x.shape[0], -1)
        h = jnp.maximum(xf @ w1_f + b1_f, 0.0)
        return h @ w2_f + b2_f

    ref_bf16 = ref_net_bf16(x0)
    ref_f32 = ref_net_f32(x0)

    assert jnp.allclose(y, ref_bf16, atol=5e-2, rtol=5e-2)
    assert jnp.allclose(anchor, ref_bf16, atol=5e-2, rtol=5e-2)
    assert jnp.allclose(y, ref_f32, atol=1.5e-1, rtol=1.5e-1)  # bf16 matmul tolerance
    assert jnp.allclose(positive, ref_net_bf16(x1), atol=5e-2, rtol=5e-2)
    assert jnp.allclose(negative, ref_net_bf16(x2), atol=5e-2, rtol=5e-2)
    assert jnp.allclose(yb, ref_net_bf16(xb), atol=5e-2, rtol=5e-2)
    assert jnp.allclose(yb, ref_net_f32(xb), atol=1.5e-1, rtol=1.5e-1)

    print("KERNEL_OK")
</pallas_src>

<mosaic_0001>
module attributes {stable_mosaic.version = 11 : i64} {
  func.func @kernel(%arg0: i32, %arg1: memref<2x1024xf32, #tpu.memory_space<vmem>>, %arg2: memref<2x1024xf32, #tpu.memory_space<vmem>>, %arg3: memref<2x1024xf32, #tpu.memory_space<vmem>>, %arg4: memref<1024x128xbf16, #tpu.memory_space<vmem>>, %arg5: memref<1x128xf32, #tpu.memory_space<vmem>>, %arg6: memref<128x128xbf16, #tpu.memory_space<vmem>>, %arg7: memref<1x128xf32, #tpu.memory_space<vmem>>, %arg8: memref<2x128xf32, #tpu.memory_space<vmem>>, %arg9: memref<2x128xf32, #tpu.memory_space<vmem>>, %arg10: memref<2x128xf32, #tpu.memory_space<vmem>>) attributes {dimension_semantics = [#tpu.dimension_semantics<parallel>], iteration_bounds = array<i64: 1>, scalar_prefetch = 0 : i64, scratch_operands = 0 : i64, tpu.core_type = #tpu.core_type<tc>, window_params = [{transform_indices = @transform_0, window_bounds = array<i64: 2, 1024>}, {transform_indices = @transform_1, window_bounds = array<i64: 2, 1024>}, {transform_indices = @transform_2, window_bounds = array<i64: 2, 1024>}, {pipeline_mode = #tpu.pipeline_mode<synchronous>, transform_indices = @transform_3, window_bounds = array<i64: 1024, 128>}, {pipeline_mode = #tpu.pipeline_mode<synchronous>, transform_indices = @transform_4, window_bounds = array<i64: 1, 128>}, {pipeline_mode = #tpu.pipeline_mode<synchronous>, transform_indices = @transform_5, window_bounds = array<i64: 128, 128>}, {pipeline_mode = #tpu.pipeline_mode<synchronous>, transform_indices = @transform_6, window_bounds = array<i64: 1, 128>}, {transform_indices = @transform_7, window_bounds = array<i64: 2, 128>}, {transform_indices = @transform_8, window_bounds = array<i64: 2, 128>}, {transform_indices = @transform_9, window_bounds = array<i64: 2, 128>}]} {
    %c0 = arith.constant 0 : index
    %c0_0 = arith.constant 0 : index
    %0 = vector.load %arg4[%c0, %c0_0] : memref<1024x128xbf16, #tpu.memory_space<vmem>>, vector<1024x128xbf16>
    %c0_1 = arith.constant 0 : index
    %c0_2 = arith.constant 0 : index
    %1 = vector.load %arg5[%c0_1, %c0_2] : memref<1x128xf32, #tpu.memory_space<vmem>>, vector<1x128xf32>
    %c0_3 = arith.constant 0 : index
    %c0_4 = arith.constant 0 : index
    %2 = vector.load %arg6[%c0_3, %c0_4] : memref<128x128xbf16, #tpu.memory_space<vmem>>, vector<128x128xbf16>
    %c0_5 = arith.constant 0 : index
    %c0_6 = arith.constant 0 : index
    %3 = vector.load %arg7[%c0_5, %c0_6] : memref<1x128xf32, #tpu.memory_space<vmem>>, vector<1x128xf32>
    %c0_7 = arith.constant 0 : index
    %c0_8 = arith.constant 0 : index
    %4 = vector.load %arg1[%c0_7, %c0_8] : memref<2x1024xf32, #tpu.memory_space<vmem>>, vector<2x1024xf32>
    %5 = arith.truncf %4 : vector<2x1024xf32> to vector<2x1024xbf16>
    %cst = arith.constant dense<0.000000e+00> : vector<2x128xf32>
    %6 = tpu.matmul %5, %0, %cst {dimension_numbers = #tpu.dot_dimension_numbers<[1], [0], [0], [1], [0, 0, 1, 1], [], []>} : vector<2x1024xbf16>, vector<1024x128xbf16>, vector<2x128xf32> -> vector<2x128xf32>
    %7 = vector.broadcast %1 : vector<1x128xf32> to vector<2x128xf32>
    %8 = arith.addf %6, %7 : vector<2x128xf32>
    %cst_9 = arith.constant 0.000000e+00 : f32
    %9 = vector.broadcast %cst_9 : f32 to vector<2x128xf32>
    %10 = arith.maximumf %8, %9 : vector<2x128xf32>
    %11 = arith.truncf %10 : vector<2x128xf32> to vector<2x128xbf16>
    %cst_10 = arith.constant dense<0.000000e+00> : vector<2x128xf32>
    %12 = tpu.matmul %11, %2, %cst_10 {dimension_numbers = #tpu.dot_dimension_numbers<[1], [0], [0], [1], [0, 0, 1, 1], [], []>} : vector<2x128xbf16>, vector<128x128xbf16>, vector<2x128xf32> -> vector<2x128xf32>
    %13 = vector.broadcast %3 : vector<1x128xf32> to vector<2x128xf32>
    %14 = arith.addf %12, %13 : vector<2x128xf32>
    %c0_11 = arith.constant 0 : index
    %c0_12 = arith.constant 0 : index
    %15 = vector.load %arg8[%c0_11, %c0_12] : memref<2x128xf32, #tpu.memory_space<vmem>>, vector<2x128xf32>
    tpu.vector_store %arg8[%c0_11, %c0_12], %14 {strides = array<i32>} : memref<2x128xf32, #tpu.memory_space<vmem>>, vector<2x128xf32>,
    %c0_13 = arith.constant 0 : index
    %c0_14 = arith.constant 0 : index
    %16 = vector.load %arg2[%c0_13, %c0_14] : memref<2x1024xf32, #tpu.memory_space<vmem>>, vector<2x1024xf32>
    %17 = arith.truncf %16 : vector<2x1024xf32> to vector<2x1024xbf16>
    %cst_15 = arith.constant dense<0.000000e+00> : vector<2x128xf32>
    %18 = tpu.matmul %17, %0, %cst_15 {dimension_numbers = #tpu.dot_dimension_numbers<[1], [0], [0], [1], [0, 0, 1, 1], [], []>} : vector<2x1024xbf16>, vector<1024x128xbf16>, vector<2x128xf32> -> vector<2x128xf32>
    %19 = vector.broadcast %1 : vector<1x128xf32> to vector<2x128xf32>
    %20 = arith.addf %18, %19 : vector<2x128xf32>
    %cst_16 = arith.constant 0.000000e+00 : f32
    %21 = vector.broadcast %cst_16 : f32 to vector<2x128xf32>
    %22 = arith.maximumf %20, %21 : vector<2x128xf32>
    %23 = arith.truncf %22 : vector<2x128xf32> to vector<2x128xbf16>
    %cst_17 = arith.constant dense<0.000000e+00> : vector<2x128xf32>
    %24 = tpu.matmul %23, %2, %cst_17 {dimension_numbers = #tpu.dot_dimension_numbers<[1], [0], [0], [1], [0, 0, 1, 1], [], []>} : vector<2x128xbf16>, vector<128x128xbf16>, vector<2x128xf32> -> vector<2x128xf32>
    %25 = vector.broadcast %3 : vector<1x128xf32> to vector<2x128xf32>
    %26 = arith.addf %24, %25 : vector<2x128xf32>
    %c0_18 = arith.constant 0 : index
    %c0_19 = arith.constant 0 : index
    %27 = vector.load %arg9[%c0_18, %c0_19] : memref<2x128xf32, #tpu.memory_space<vmem>>, vector<2x128xf32>
    tpu.vector_store %arg9[%c0_18, %c0_19], %26 {strides = array<i32>} : memref<2x128xf32, #tpu.memory_space<vmem>>, vector<2x128xf32>,
    %c0_20 = arith.constant 0 : index
    %c0_21 = arith.constant 0 : index
    %28 = vector.load %arg3[%c0_20, %c0_21] : memref<2x1024xf32, #tpu.memory_space<vmem>>, vector<2x1024xf32>
    %29 = arith.truncf %28 : vector<2x1024xf32> to vector<2x1024xbf16>
    %cst_22 = arith.constant dense<0.000000e+00> : vector<2x128xf32>
    %30 = tpu.matmul %29, %0, %cst_22 {dimension_numbers = #tpu.dot_dimension_numbers<[1], [0], [0], [1], [0, 0, 1, 1], [], []>} : vector<2x1024xbf16>, vector<1024x128xbf16>, vector<2x128xf32> -> vector<2x128xf32>
    %31 = vector.broadcast %1 : vector<1x128xf32> to vector<2x128xf32>
    %32 = arith.addf %30, %31 : vector<2x128xf32>
    %cst_23 = arith.constant 0.000000e+00 : f32
    %33 = vector.broadcast %cst_23 : f32 to vector<2x128xf32>
    %34 = arith.maximumf %32, %33 : vector<2x128xf32>
    %35 = arith.truncf %34 : vector<2x128xf32> to vector<2x128xbf16>
    %cst_24 = arith.constant dense<0.000000e+00> : vector<2x128xf32>
    %36 = tpu.matmul %35, %2, %cst_24 {dimension_numbers = #tpu.dot_dimension_numbers<[1], [0], [0], [1], [0, 0, 1, 1], [], []>} : vector<2x128xbf16>, vector<128x128xbf16>, vector<2x128xf32> -> vector<2x128xf32>
    %37 = vector.broadcast %3 : vector<1x128xf32> to vector<2x128xf32>
    %38 = arith.addf %36, %37 : vector<2x128xf32>
    %c0_25 = arith.constant 0 : index
    %c0_26 = arith.constant 0 : index
    %39 = vector.load %arg10[%c0_25, %c0_26] : memref<2x128xf32, #tpu.memory_space<vmem>>, vector<2x128xf32>
    tpu.vector_store %arg10[%c0_25, %c0_26], %38 {strides = array<i32>} : memref<2x128xf32, #tpu.memory_space<vmem>>, vector<2x128xf32>,
    return
  }
  func.func @transform_0(%arg0: i32) -> (i32, i32) {
    %c0_i32 = arith.constant 0 : i32
    %c0_i32_0 = arith.constant 0 : i32
    return %arg0, %c0_i32 : i32, i32
  }
  func.func @transform_1(%arg0: i32) -> (i32, i32) {
    %c0_i32 = arith.constant 0 : i32
    %c0_i32_0 = arith.constant 0 : i32
    return %arg0, %c0_i32 : i32, i32
  }
  func.func @transform_2(%arg0: i32) -> (i32, i32) {
    %c0_i32 = arith.constant 0 : i32
    %c0_i32_0 = arith.constant 0 : i32
    return %arg0, %c0_i32 : i32, i32
  }
  func.func @transform_3(%arg0: i32) -> (i32, i32) {
    %c0_i32 = arith.constant 0 : i32
    %c0_i32_0 = arith.constant 0 : i32
    %c0_i32_1 = arith.constant 0 : i32
    return %c0_i32, %c0_i32_0 : i32, i32
  }
  func.func @transform_4(%arg0: i32) -> (i32, i32) {
    %c0_i32 = arith.constant 0 : i32
    %c0_i32_0 = arith.constant 0 : i32
    %c0_i32_1 = arith.constant 0 : i32
    return %c0_i32, %c0_i32_0 : i32, i32
  }
  func.func @transform_5(%arg0: i32) -> (i32, i32) {
    %c0_i32 = arith.constant 0 : i32
    %c0_i32_0 = arith.constant 0 : i32
    %c0_i32_1 = arith.constant 0 : i32
    return %c0_i32, %c0_i32_0 : i32, i32
  }
  func.func @transform_6(%arg0: i32) -> (i32, i32) {
    %c0_i32 = arith.constant 0 : i32
    %c0_i32_0 = arith.constant 0 : i32
    %c0_i32_1 = arith.constant 0 : i32
    return %c0_i32, %c0_i32_0 : i32, i32
  }
  func.func @transform_7(%arg0: i32) -> (i32, i32) {
    %c0_i32 = arith.constant 0 : i32
    %c0_i32_0 = arith.constant 0 : i32
    return %arg0, %c0_i32 : i32, i32
  }
  func.func @transform_8(%arg0: i32) -> (i32, i32) {
    %c0_i32 = arith.constant 0 : i32
    %c0_i32_0 = arith.constant 0 : i32
    return %arg0, %c0_i32 : i32, i32
  }
  func.func @transform_9(%arg0: i32) -> (i32, i32) {
    %c0_i32 = arith.constant 0 : i32
    %c0_i32_0 = arith.constant 0 : i32
    return %arg0, %c0_i32 : i32, i32
  }
}

</mosaic_0001>

<llo_original>
// kernel: _triplet_apply.1
$region0: #{_triplet_apply.1}
  #allocation0 [shape = 'u32[]', space=smem, size = 0x4, offset = 0x4, fixed_abs, tag = 'smem constant byte address 0x4 - core index']
  #allocation1 [shape = 'u32[144,128]{1,0:T(1,128)}', space=vmem, size = 0x12000, scoped, tag = 'internal scratch']
  %s0 = inlined_call_operand.vmem [shape: f32[2,1024], index: 0, kind: input, shape index: {}]
  %s1 = inlined_call_operand.vmem [shape: f32[2,1024], index: 1, kind: input, shape index: {}]
  %s2 = inlined_call_operand.vmem [shape: f32[2,1024], index: 2, kind: input, shape index: {}]
  %s3 = inlined_call_operand.hbm [shape: bf16[1024,128], index: 3, kind: input, shape index: {}]
  %s4 = inlined_call_operand.vmem [shape: f32[1,128], index: 4, kind: input, shape index: {}]
  %s5 = inlined_call_operand.vmem [shape: bf16[128,128], index: 5, kind: input, shape index: {}]
  %s6 = inlined_call_operand.vmem [shape: f32[1,128], index: 6, kind: input, shape index: {}]
  %s7 = inlined_call_operand.hbm [shape: f32[2,128], index: 7, kind: output, shape index: {0}]
  %s8 = inlined_call_operand.hbm [shape: f32[2,128], index: 8, kind: output, shape index: {1}]
  %s9 = inlined_call_operand.hbm [shape: f32[2,128], index: 9, kind: output, shape index: {2}]
  %10 = xla_tuple %s7, %s8, %s9
  %s11 = sld [smem:[#allocation0]]
  $region58: #{_triplet_apply.1} parent=0
    _
  %s13 = ssub.s32 1, %s11
  %s14 = scalar_select 0, %s13, %s11
  $region1: #{_triplet_apply.1} parent=0
    #allocation2 [shape = 'u8[262144]{0}', space=vmem, size = 0x40000, scoped, tag = 'input window, operand 3, single buffered']
    #allocation3 [shape = 's32[1]{0}', space=sflag, size = 0x4, scoped, tag = 'scoped memory for _triplet_apply.1']
    #allocation4 [shape = 's32[1]{0}', space=sflag, size = 0x4, scoped, tag = 'scoped memory for _triplet_apply.1']
    #allocation5 [shape = 'u8[1024]{0}', space=vmem, size = 0x400, scoped, tag = 'output window, operand 0, single buffered']
    #allocation6 [shape = 'u8[1024]{0}', space=vmem, size = 0x400, scoped, tag = 'output window, operand 1, single buffered']
    #allocation7 [shape = 's32[1]{0}', space=sflag, size = 0x4, scoped, tag = 'scoped memory for _triplet_apply.1']
    #allocation8 [shape = 'u8[1024]{0}', space=vmem, size = 0x400, scoped, tag = 'output window, operand 2, single buffered']
    %15 = vsyncpa [#allocation3], 0
    %16 = vsyncpa [#allocation4], 0
    %17 = vsyncpa [#allocation7], 0
    // Predicated region
    $region2: #{_triplet_apply.1} parent=1 // pred_check
      _
    $region3: #{_triplet_apply.1} parent=1 // pred_check_branch
      %19 = sbr.rel (0) target = $region5
    $region4: #{_triplet_apply.1} parent=1 // pred_region
      _
    $region5: #{_triplet_apply.1} parent=1 // pred_fallthru
      _
    // Predicated region
    $region6: #{_triplet_apply.1} parent=1 // pred_check
      _
    $region7: #{_triplet_apply.1} parent=1 // pred_check_branch
      %21 = sbr.rel (0) target = $region9
    $region8: #{_triplet_apply.1} parent=1 // pred_region
      _
    $region9: #{_triplet_apply.1} parent=1 // pred_fallthru
      _
    // Predicated region
    $region10: #{_triplet_apply.1} parent=1 // pred_check
      _
    $region11: #{_triplet_apply.1} parent=1 // pred_check_branch
      %23 = sbr.rel (0) target = $region13
    $region12: #{_triplet_apply.1} parent=1 // pred_region
      _
    $region13: #{_triplet_apply.1} parent=1 // pred_fallthru
      _
    // Predicated region
    $region14: #{_triplet_apply.1} parent=1 // pred_check
      _
    $region15: #{_triplet_apply.1} parent=1 // pred_check_branch
      %25 = sbr.rel (0) target = $region17
    $region16: #{_triplet_apply.1} parent=1 // pred_region
      %s27 = ssub.s32 8192, 8192
      %28 = vsyncadd [#allocation3], %s27
      %s29 = sshll.u32 [#allocation2], 4
      %s30 = int_to_ptr.vmem [resolvable:$true] %s29
      %35 = dma.hbm_to_vmem [thread:$0]  %s3, 8192, %s30, [#allocation3], 64, 64, 4
    $region17: #{_triplet_apply.1} parent=1 // pred_fallthru
      _
    // Predicated region
    $region18: #{_triplet_apply.1} parent=1 // pred_check
      _
    $region19: #{_triplet_apply.1} parent=1 // pred_check_branch
      %37 = sbr.rel (0) target = $region21
    $region20: #{_triplet_apply.1} parent=1 // pred_region
      _
    $region21: #{_triplet_apply.1} parent=1 // pred_fallthru
      _
    // Predicated region
    $region22: #{_triplet_apply.1} parent=1 // pred_check
      _
    $region23: #{_triplet_apply.1} parent=1 // pred_check_branch
      %39 = sbr.rel (0) target = $region25
    $region24: #{_triplet_apply.1} parent=1 // pred_region
      _
    $region25: #{_triplet_apply.1} parent=1 // pred_fallthru
      _
    // Predicated region
    $region26: #{_triplet_apply.1} parent=1 // pred_check
      _
    $region27: #{_triplet_apply.1} parent=1 // pred_check_branch
      %41 = sbr.rel (0) target = $region29
    $region28: #{_triplet_apply.1} parent=1 // pred_region
      _
    $region29: #{_triplet_apply.1} parent=1 // pred_fallthru
      _
    // Predicated region
    $region30: #{_triplet_apply.1} parent=1 // pred_check
      _
    $region31: #{_triplet_apply.1} parent=1 // pred_check_branch
      %43 = sbr.rel (0) target = $region33
    $region32: #{_triplet_apply.1} parent=1 // pred_region
      %44 = dma.done [#allocation3], 8192
    $region33: #{_triplet_apply.1} parent=1 // pred_fallthru
      _
    %v46 = vld [vmem:[#allocation2] sm:$0xf]
    %v47 = vld [vmem:[#allocation2 + $0x4] sm:$0xf]
    %v48 = vld [vmem:[#allocation2 + $0x8] sm:$0xf]
    %v49 = vld [vmem:[#allocation2 + $0xc] sm:$0xf]
    %v50 = vld [vmem:[#allocation2 + $0x10] sm:$0xf]
    %v51 = vld [vmem:[#allocation2 + $0x14] sm:$0xf]
    %v52 = vld [vmem:[#allocation2 + $0x18] sm:$0xf]
    %v53 = vld [vmem:[#allocation2 + $0x1c] sm:$0xf]
    %v54 = vld [vmem:[#allocation2 + $0x20] sm:$0xf]
    %v55 = vld [vmem:[#allocation2 + $0x24] sm:$0xf]
    %v56 = vld [vmem:[#allocation2 + $0x28] sm:$0xf]
    %v57 = vld [vmem:[#allocation2 + $0x2c] sm:$0xf]
    %v58 = vld [vmem:[#allocation2 + $0x30] sm:$0xf]
    %v59 = vld [vmem:[#allocation2 + $0x34] sm:$0xf]
    %v60 = vld [vmem:[#allocation2 + $0x38] sm:$0xf]
    %v61 = vld [vmem:[#allocation2 + $0x3c] sm:$0xf]
    %v62 = vld [vmem:[#allocation2 + $0x40] sm:$0xf]
    %v63 = vld [vmem:[#allocation2 + $0x44] sm:$0xf]
    %v64 = vld [vmem:[#allocation2 + $0x48] sm:$0xf]
    %v65 = vld [vmem:[#allocation2 + $0x4c] sm:$0xf]
    %v66 = vld [vmem:[#allocation2 + $0x50] sm:$0xf]
    %v67 = vld [vmem:[#allocation2 + $0x54] sm:$0xf]
    %v68 = vld [vmem:[#allocation2 + $0x58] sm:$0xf]
    %v69 = vld [vmem:[#allocation2 + $0x5c] sm:$0xf]
    %v70 = vld [vmem:[#allocation2 + $0x60] sm:$0xf]
    %v71 = vld [vmem:[#allocation2 + $0x64] sm:$0xf]
    %v72 = vld [vmem:[#allocation2 + $0x68] sm:$0xf]
    %v73 = vld [vmem:[#allocation2 + $0x6c] sm:$0xf]
    %v74 = vld [vmem:[#allocation2 + $0x70] sm:$0xf]
    %v75 = vld [vmem:[#allocation2 + $0x74] sm:$0xf]
    %v76 = vld [vmem:[#allocation2 + $0x78] sm:$0xf]
    %v77 = vld [vmem:[#allocation2 + $0x7c] sm:$0xf]
    %v78 = vld [vmem:[#allocation2 + $0x80] sm:$0xf]
    %v79 = vld [vmem:[#allocation2 + $0x84] sm:$0xf]
    %v80 = vld [vmem:[#allocation2 + $0x88] sm:$0xf]
    %v81 = vld [vmem:[#allocation2 + $0x8c] sm:$0xf]
    %v82 = vld [vmem:[#allocation2 + $0x90] sm:$0xf]
    %v83 = vld [vmem:[#allocation2 + $0x94] sm:$0xf]
    %v84 = vld [vmem:[#allocation2 + $0x98] sm:$0xf]
    %v85 = vld [vmem:[#allocation2 + $0x9c] sm:$0xf]
    %v86 = vld [vmem:[#allocation2 + $0xa0] sm:$0xf]
    %v87 = vld [vmem:[#allocation2 + $0xa4] sm:$0xf]
    %v88 = vld [vmem:[#allocation2 + $0xa8] sm:$0xf]
    %v89 = vld [vmem:[#allocation2 + $0xac] sm:$0xf]
    %v90 = vld [vmem:[#allocation2 + $0xb0] sm:$0xf]
    %v91 = vld [vmem:[#allocation2 + $0xb4] sm:$0xf]
    %v92 = vld [vmem:[#allocation2 + $0xb8] sm:$0xf]
    %v93 = vld [vmem:[#allocation2 + $0xbc] sm:$0xf]
    %v94 = vld [vmem:[#allocation2 + $0xc0] sm:$0xf]
    %v95 = vld [vmem:[#allocation2 + $0xc4] sm:$0xf]
    %v96 = vld [vmem:[#allocation2 + $0xc8] sm:$0xf]
    %v97 = vld [vmem:[#allocation2 + $0xcc] sm:$0xf]
    %v98 = vld [vmem:[#allocation2 + $0xd0] sm:$0xf]
    %v99 = vld [vmem:[#allocation2 + $0xd4] sm:$0xf]
    %v100 = vld [vmem:[#allocation2 + $0xd8] sm:$0xf]
    %v101 = vld [vmem:[#allocation2 + $0xdc] sm:$0xf]
    %v102 = vld [vmem:[#allocation2 + $0xe0] sm:$0xf]
    %v103 = vld [vmem:[#allocation2 + $0xe4] sm:$0xf]
    %v104 = vld [vmem:[#allocation2 + $0xe8] sm:$0xf]
    %v105 = vld [vmem:[#allocation2 + $0xec] sm:$0xf]
    %v106 = vld [vmem:[#allocation2 + $0xf0] sm:$0xf]
    %v107 = vld [vmem:[#allocation2 + $0xf4] sm:$0xf]
    %v108 = vld [vmem:[#allocation2 + $0xf8] sm:$0xf]
    %v109 = vld [vmem:[#allocation2 + $0xfc] sm:$0xf]
    %v110 = vld [vmem:[#allocation2 + $0x100] sm:$0xf]
    %v111 = vld [vmem:[#allocation2 + $0x104] sm:$0xf]
    %v112 = vld [vmem:[#allocation2 + $0x108] sm:$0xf]
    %v113 = vld [vmem:[#allocation2 + $0x10c] sm:$0xf]
    %v114 = vld [vmem:[#allocation2 + $0x110] sm:$0xf]
    %v115 = vld [vmem:[#allocation2 + $0x114] sm:$0xf]
    %v116 = vld [vmem:[#allocation2 + $0x118] sm:$0xf]
    %v117 = vld [vmem:[#allocation2 + $0x11c] sm:$0xf]
    %v118 = vld [vmem:[#allocation2 + $0x120] sm:$0xf]
    %v119 = vld [vmem:[#allocation2 + $0x124] sm:$0xf]
    %v120 = vld [vmem:[#allocation2 + $0x128] sm:$0xf]
    %v121 = vld [vmem:[#allocation2 + $0x12c] sm:$0xf]
    %v122 = vld [vmem:[#allocation2 + $0x130] sm:$0xf]
    %v123 = vld [vmem:[#allocation2 + $0x134] sm:$0xf]
    %v124 = vld [vmem:[#allocation2 + $0x138] sm:$0xf]
    %v125 = vld [vmem:[#allocation2 + $0x13c] sm:$0xf]
    %v126 = vld [vmem:[#allocation2 + $0x140] sm:$0xf]
    %v127 = vld [vmem:[#allocation2 + $0x144] sm:$0xf]
    %v128 = vld [vmem:[#allocation2 + $0x148] sm:$0xf]
    %v129 = vld [vmem:[#allocation2 + $0x14c] sm:$0xf]
    %v130 = vld [vmem:[#allocation2 + $0x150] sm:$0xf]
    %v131 = vld [vmem:[#allocation2 + $0x154] sm:$0xf]
    %v132 = vld [vmem:[#allocation2 + $0x158] sm:$0xf]
    %v133 = vld [vmem:[#allocation2 + $0x15c] sm:$0xf]
    %v134 = vld [vmem:[#allocation2 + $0x160] sm:$0xf]
    %v135 = vld [vmem:[#allocation2 + $0x164] sm:$0xf]
    %v136 = vld [vmem:[#allocation2 + $0x168] sm:$0xf]
    %v137 = vld [vmem:[#allocation2 + $0x16c] sm:$0xf]
    %v138 = vld [vmem:[#allocation2 + $0x170] sm:$0xf]
    %v139 = vld [vmem:[#allocation2 + $0x174] sm:$0xf]
    %v140 = vld [vmem:[#allocation2 + $0x178] sm:$0xf]
    %v141 = vld [vmem:[#allocation2 + $0x17c] sm:$0xf]
    %v142 = vld [vmem:[#allocation2 + $0x180] sm:$0xf]
    %v143 = vld [vmem:[#allocation2 + $0x184] sm:$0xf]
    %v144 = vld [vmem:[#allocation2 + $0x188] sm:$0xf]
    %v145 = vld [vmem:[#allocation2 + $0x18c] sm:$0xf]
    %v146 = vld [vmem:[#allocation2 + $0x190] sm:$0xf]
    %v147 = vld [vmem:[#allocation2 + $0x194] sm:$0xf]
    %v148 = vld [vmem:[#allocation2 + $0x198] sm:$0xf]
    %v149 = vld [vmem:[#allocation2 + $0x19c] sm:$0xf]
    %v150 = vld [vmem:[#allocation2 + $0x1a0] sm:$0xf]
    %v151 = vld [vmem:[#allocation2 + $0x1a4] sm:$0xf]
    %v152 = vld [vmem:[#allocation2 + $0x1a8] sm:$0xf]
    %v153 = vld [vmem:[#allocation2 + $0x1ac] sm:$0xf]
    %v154 = vld [vmem:[#allocation2 + $0x1b0] sm:$0xf]
    %v155 = vld [vmem:[#allocation2 + $0x1b4] sm:$0xf]
    %v156 = vld [vmem:[#allocation2 + $0x1b8] sm:$0xf]
    %v157 = vld [vmem:[#allocation2 + $0x1bc] sm:$0xf]
    %v158 = vld [vmem:[#allocation2 + $0x1c0] sm:$0xf]
    %v159 = vld [vmem:[#allocation2 + $0x1c4] sm:$0xf]
    %v160 = vld [vmem:[#allocation2 + $0x1c8] sm:$0xf]
    %v161 = vld [vmem:[#allocation2 + $0x1cc] sm:$0xf]
    %v162 = vld [vmem:[#allocation2 + $0x1d0] sm:$0xf]
    %v163 = vld [vmem:[#allocation2 + $0x1d4] sm:$0xf]
    %v164 = vld [vmem:[#allocation2 + $0x1d8] sm:$0xf]
    %v165 = vld [vmem:[#allocation2 + $0x1dc] sm:$0xf]
    %v166 = vld [vmem:[#allocation2 + $0x1e0] sm:$0xf]
    %v167 = vld [vmem:[#allocation2 + $0x1e4] sm:$0xf]
    %v168 = vld [vmem:[#allocation2 + $0x1e8] sm:$0xf]
    %v169 = vld [vmem:[#allocation2 + $0x1ec] sm:$0xf]
    %v170 = vld [vmem:[#allocation2 + $0x1f0] sm:$0xf]
    %v171 = vld [vmem:[#allocation2 + $0x1f4] sm:$0xf]
    %v172 = vld [vmem:[#allocation2 + $0x1f8] sm:$0xf]
    %v173 = vld [vmem:[#allocation2 + $0x1fc] sm:$0xf]
    %v174 = vld [vmem:[%s4] sm:$0x1]
    %v175 = vld [vmem:[%s5] sm:$0xf]
    %v176 = vld [vmem:[%s5 + $0x4] sm:$0xf]
    %v177 = vld [vmem:[%s5 + $0x8] sm:$0xf]
    %v178 = vld [vmem:[%s5 + $0xc] sm:$0xf]
    %v179 = vld [vmem:[%s5 + $0x10] sm:$0xf]
    %v180 = vld [vmem:[%s5 + $0x14] sm:$0xf]
    %v181 = vld [vmem:[%s5 + $0x18] sm:$0xf]
    %v182 = vld [vmem:[%s5 + $0x1c] sm:$0xf]
    %v183 = vld [vmem:[%s5 + $0x20] sm:$0xf]
    %v184 = vld [vmem:[%s5 + $0x24] sm:$0xf]
    %v185 = vld [vmem:[%s5 + $0x28] sm:$0xf]
    %v186 = vld [vmem:[%s5 + $0x2c] sm:$0xf]
    %v187 = vld [vmem:[%s5 + $0x30] sm:$0xf]
    %v188 = vld [vmem:[%s5 + $0x34] sm:$0xf]
    %v189 = vld [vmem:[%s5 + $0x38] sm:$0xf]
    %v190 = vld [vmem:[%s5 + $0x3c] sm:$0xf]
    %v191 = vld [vmem:[%s6] sm:$0x1]
    %v192 = vld [vmem:[%s0] sm:$0xff]
    %v193 = vld [vmem:[%s0 + $0x8] sm:$0xff]
    %v196 = vcombine.high %v192, %v192
    %v198 = vunpack.c.l.s4 1983009808
    %v199 = vunpack.c.0.s8 %v198
    %v200 = vlaneseq
    %v201 = vshrl.u32 %v200, 7
    %v202 = vsub.s32 %v199, %v201
    %v203 = vrot.slane %v192, %v202
    %v205 = vunpack.c.l.s4 1983009808
    %v206 = vunpack.c.0.s8 %v205
    %v207 = vlaneseq
    %v208 = vshrl.u32 %v207, 7
    %v209 = vsub.s32 %v206, %v208
    %v210 = vrot.slane %v196, %v209
    %v211 = vcombine.high %v203, %v203
    %v212 = vcombine.high %v210, %v210
    %v213 = vcombine.high %v193, %v193
    %v215 = vunpack.c.l.s4 1983009808
    %v216 = vunpack.c.0.s8 %v215
    %v217 = vlaneseq
    %v218 = vshrl.u32 %v217, 7
    %v219 = vsub.s32 %v216, %v218
    %v220 = vrot.slane %v193, %v219
    %v222 = vunpack.c.l.s4 1983009808
    %v223 = vunpack.c.0.s8 %v222
    %v224 = vlaneseq
    %v225 = vshrl.u32 %v224, 7
    %v226 = vsub.s32 %v223, %v225
    %v227 = vrot.slane %v213, %v226
    %v228 = vcombine.high %v220, %v220
    %v229 = vcombine.high %v227, %v227
    %v238 = vpack.c.bf16 %v203, %v203
    %v239 = vpack.c.bf16 %v211, %v211
    %v240 = vpack.c.bf16 %v210, %v210
    %v241 = vpack.c.bf16 %v212, %v212
    %v242 = vpack.c.bf16 %v220, %v220
    %v243 = vpack.c.bf16 %v228, %v228
    %v244 = vpack.c.bf16 %v227, %v227
    %v245 = vpack.c.bf16 %v229, %v229
    %v247 = vlaneseq
    %v248 = vshrl.u32 %v247, 7
    %v249 = vsub.s32 0, %v248
    %v250 = vrot.slane %v174, %v249
    %v380 = vunpack.c.l.b16 %v46
    %v381 = vunpack.c.l.b16 %v47
    %v382 = vunpack.c.l.b16 %v48
    %v383 = vunpack.c.l.b16 %v49
    %v384 = vunpack.c.l.b16 %v50
    %v385 = vunpack.c.l.b16 %v51
    %v386 = vunpack.c.l.b16 %v52
    %v387 = vunpack.c.l.b16 %v53
    %v388 = vunpack.c.l.b16 %v54
    %v389 = vunpack.c.l.b16 %v55
    %v390 = vunpack.c.l.b16 %v56
    %v391 = vunpack.c.l.b16 %v57
    %v392 = vunpack.c.l.b16 %v58
    %v393 = vunpack.c.l.b16 %v59
    %v394 = vunpack.c.l.b16 %v60
    %v395 = vunpack.c.l.b16 %v61
    %v396 = vunpack.c.l.b16 %v62
    %v397 = vunpack.c.l.b16 %v63
    %v398 = vunpack.c.l.b16 %v64
    %v399 = vunpack.c.l.b16 %v65
    %v400 = vunpack.c.l.b16 %v66
    %v401 = vunpack.c.l.b16 %v67
    %v402 = vunpack.c.l.b16 %v68
    %v403 = vunpack.c.l.b16 %v69
    %v404 = vunpack.c.l.b16 %v70
    %v405 = vunpack.c.l.b16 %v71
    %v406 = vunpack.c.l.b16 %v72
    %v407 = vunpack.c.l.b16 %v73
    %v408 = vunpack.c.l.b16 %v74
    %v409 = vunpack.c.l.b16 %v75
    %v410 = vunpack.c.l.b16 %v76
    %v411 = vunpack.c.l.b16 %v77
    %v412 = vunpack.c.l.b16 %v78
    %v413 = vunpack.c.l.b16 %v79
    %v414 = vunpack.c.l.b16 %v80
    %v415 = vunpack.c.l.b16 %v81
    %v416 = vunpack.c.l.b16 %v82
    %v417 = vunpack.c.l.b16 %v83
    %v418 = vunpack.c.l.b16 %v84
    %v419 = vunpack.c.l.b16 %v85
    %v420 = vunpack.c.l.b16 %v86
    %v421 = vunpack.c.l.b16 %v87
    %v422 = vunpack.c.l.b16 %v88
    %v423 = vunpack.c.l.b16 %v89
    %v424 = vunpack.c.l.b16 %v90
    %v425 = vunpack.c.l.b16 %v91
    %v426 = vunpack.c.l.b16 %v92
    %v427 = vunpack.c.l.b16 %v93
    %v428 = vunpack.c.l.b16 %v94
    %v429 = vunpack.c.l.b16 %v95
    %v430 = vunpack.c.l.b16 %v96
    %v431 = vunpack.c.l.b16 %v97
    %v432 = vunpack.c.l.b16 %v98
    %v433 = vunpack.c.l.b16 %v99
    %v434 = vunpack.c.l.b16 %v100
    %v435 = vunpack.c.l.b16 %v101
    %v436 = vunpack.c.l.b16 %v102
    %v437 = vunpack.c.l.b16 %v103
    %v438 = vunpack.c.l.b16 %v104
    %v439 = vunpack.c.l.b16 %v105
    %v440 = vunpack.c.l.b16 %v106
    %v441 = vunpack.c.l.b16 %v107
    %v442 = vunpack.c.l.b16 %v108
    %v443 = vunpack.c.l.b16 %v109
    %v444 = vunpack.c.l.b16 %v110
    %v445 = vunpack.c.l.b16 %v111
    %v446 = vunpack.c.l.b16 %v112
    %v447 = vunpack.c.l.b16 %v113
    %v448 = vunpack.c.l.b16 %v114
    %v449 = vunpack.c.l.b16 %v115
    %v450 = vunpack.c.l.b16 %v116
    %v451 = vunpack.c.l.b16 %v117
    %v452 = vunpack.c.l.b16 %v118
    %v453 = vunpack.c.l.b16 %v119
    %v454 = vunpack.c.l.b16 %v120
    %v455 = vunpack.c.l.b16 %v121
    %v456 = vunpack.c.l.b16 %v122
    %v457 = vunpack.c.l.b16 %v123
    %v458 = vunpack.c.l.b16 %v124
    %v459 = vunpack.c.l.b16 %v125
    %v460 = vunpack.c.l.b16 %v126
    %v461 = vunpack.c.l.b16 %v127
    %v462 = vunpack.c.l.b16 %v128
    %v463 = vunpack.c.l.b16 %v129
    %v464 = vunpack.c.l.b16 %v130
    %v465 = vunpack.c.l.b16 %v131
    %v466 = vunpack.c.l.b16 %v132
    %v467 = vunpack.c.l.b16 %v133
    %v468 = vunpack.c.l.b16 %v134
    %v469 = vunpack.c.l.b16 %v135
    %v470 = vunpack.c.l.b16 %v136
    %v471 = vunpack.c.l.b16 %v137
    %v472 = vunpack.c.l.b16 %v138
    %v473 = vunpack.c.l.b16 %v139
    %v474 = vunpack.c.l.b16 %v140
    %v475 = vunpack.c.l.b16 %v141
    %v476 = vunpack.c.l.b16 %v142
    %v477 = vunpack.c.l.b16 %v143
    %v478 = vunpack.c.l.b16 %v144
    %v479 = vunpack.c.l.b16 %v145
    %v480 = vunpack.c.l.b16 %v146
    %v481 = vunpack.c.l.b16 %v147
    %v482 = vunpack.c.l.b16 %v148
    %v483 = vunpack.c.l.b16 %v149
    %v484 = vunpack.c.l.b16 %v150
    %v485 = vunpack.c.l.b16 %v151
    %v486 = vunpack.c.l.b16 %v152
    %v487 = vunpack.c.l.b16 %v153
    %v488 = vunpack.c.l.b16 %v154
    %v489 = vunpack.c.l.b16 %v155
    %v490 = vunpack.c.l.b16 %v156
    %v491 = vunpack.c.l.b16 %v157
    %v492 = vunpack.c.l.b16 %v158
    %v493 = vunpack.c.l.b16 %v159
    %v494 = vunpack.c.l.b16 %v160
    %v495 = vunpack.c.l.b16 %v161
    %v496 = vunpack.c.l.b16 %v162
    %v497 = vunpack.c.l.b16 %v163
    %v498 = vunpack.c.l.b16 %v164
    %v499 = vunpack.c.l.b16 %v165
    %v500 = vunpack.c.l.b16 %v166
    %v501 = vunpack.c.l.b16 %v167
    %v502 = vunpack.c.l.b16 %v168
    %v503 = vunpack.c.l.b16 %v169
    %v504 = vunpack.c.l.b16 %v170
    %v505 = vunpack.c.l.b16 %v171
    %v506 = vunpack.c.l.b16 %v172
    %v507 = vunpack.c.l.b16 %v173
    %v508 = vpack.c.b16 %v381, %v380
    %v509 = vpack.c.b16 %v383, %v382
    %v510 = vpack.c.b16 %v385, %v384
    %v511 = vpack.c.b16 %v387, %v386
    %v512 = vpack.c.b16 %v389, %v388
    %v513 = vpack.c.b16 %v391, %v390
    %v514 = vpack.c.b16 %v393, %v392
    %v515 = vpack.c.b16 %v395, %v394
    %v516 = vpack.c.b16 %v397, %v396
    %v517 = vpack.c.b16 %v399, %v398
    %v518 = vpack.c.b16 %v401, %v400
    %v519 = vpack.c.b16 %v403, %v402
    %v520 = vpack.c.b16 %v405, %v404
    %v521 = vpack.c.b16 %v407, %v406
    %v522 = vpack.c.b16 %v409, %v408
    %v523 = vpack.c.b16 %v411, %v410
    %v524 = vpack.c.b16 %v413, %v412
    %v525 = vpack.c.b16 %v415, %v414
    %v526 = vpack.c.b16 %v417, %v416
    %v527 = vpack.c.b16 %v419, %v418
    %v528 = vpack.c.b16 %v421, %v420
    %v529 = vpack.c.b16 %v423, %v422
    %v530 = vpack.c.b16 %v425, %v424
    %v531 = vpack.c.b16 %v427, %v426
    %v532 = vpack.c.b16 %v429, %v428
    %v533 = vpack.c.b16 %v431, %v430
    %v534 = vpack.c.b16 %v433, %v432
    %v535 = vpack.c.b16 %v435, %v434
    %v536 = vpack.c.b16 %v437, %v436
    %v537 = vpack.c.b16 %v439, %v438
    %v538 = vpack.c.b16 %v441, %v440
    %v539 = vpack.c.b16 %v443, %v442
    %v540 = vpack.c.b16 %v445, %v444
    %v541 = vpack.c.b16 %v447, %v446
    %v542 = vpack.c.b16 %v449, %v448
    %v543 = vpack.c.b16 %v451, %v450
    %v544 = vpack.c.b16 %v453, %v452
    %v545 = vpack.c.b16 %v455, %v454
    %v546 = vpack.c.b16 %v457, %v456
    %v547 = vpack.c.b16 %v459, %v458
    %v548 = vpack.c.b16 %v461, %v460
    %v549 = vpack.c.b16 %v463, %v462
    %v550 = vpack.c.b16 %v465, %v464
    %v551 = vpack.c.b16 %v467, %v466
    %v552 = vpack.c.b16 %v469, %v468
    %v553 = vpack.c.b16 %v471, %v470
    %v554 = vpack.c.b16 %v473, %v472
    %v555 = vpack.c.b16 %v475, %v474
    %v556 = vpack.c.b16 %v477, %v476
    %v557 = vpack.c.b16 %v479, %v478
    %v558 = vpack.c.b16 %v481, %v480
    %v559 = vpack.c.b16 %v483, %v482
    %v560 = vpack.c.b16 %v485, %v484
    %v561 = vpack.c.b16 %v487, %v486
    %v562 = vpack.c.b16 %v489, %v488
    %v563 = vpack.c.b16 %v491, %v490
    %v564 = vpack.c.b16 %v493, %v492
    %v565 = vpack.c.b16 %v495, %v494
    %v566 = vpack.c.b16 %v497, %v496
    %v567 = vpack.c.b16 %v499, %v498
    %v568 = vpack.c.b16 %v501, %v500
    %v569 = vpack.c.b16 %v503, %v502
    %v570 = vpack.c.b16 %v505, %v504
    %v571 = vpack.c.b16 %v507, %v506
    %636 = vmatprep.subr.bf16.mxu0 0
    %637 = vmatpush1.bf16.msra.mxu0 %v515
    %638 = vmatprep.subr.bf16.mxu0 0
    %639 = vmatpush1.bf16.msra.mxu0 %v514
    %640 = vmatprep.subr.bf16.mxu0 0
    %641 = vmatpush1.bf16.msra.mxu0 %v513
    %642 = vmatprep.subr.bf16.mxu0 0
    %643 = vmatpush1.bf16.msra.mxu0 %v512
    %644 = vmatprep.subr.bf16.mxu0 0
    %645 = vmatpush1.bf16.msra.mxu0 %v511
    %646 = vmatprep.subr.bf16.mxu0 0
    %647 = vmatpush1.bf16.msra.mxu0 %v510
    %648 = vmatprep.subr.bf16.mxu0 0
    %649 = vmatpush1.bf16.msra.mxu0 %v509
    %650 = vmatprep.subr.bf16.mxu0 0
    %651 = vmatpush1.bf16.msra.mxu0 %v508
    %652 = vmatprep.subr.bf16.mxu0 0
    %653 = vmatpush2.bf16.msra.mxu0 %v523
    %654 = vmatprep.subr.bf16.mxu0 0
    %655 = vmatpush2.bf16.msra.mxu0 %v522
    %656 = vmatprep.subr.bf16.mxu0 0
    %657 = vmatpush2.bf16.msra.mxu0 %v521
    %658 = vmatprep.subr.bf16.mxu0 0
    %659 = vmatpush2.bf16.msra.mxu0 %v520
    %660 = vmatprep.subr.bf16.mxu0 0
    %661 = vmatpush2.bf16.msra.mxu0 %v519
    %662 = vmatprep.subr.bf16.mxu0 0
    %663 = vmatpush2.bf16.msra.mxu0 %v518
    %664 = vmatprep.subr.bf16.mxu0 0
    %665 = vmatpush2.bf16.msra.mxu0 %v517
    %666 = vmatprep.subr.bf16.mxu0 0
    %667 = vmatpush2.bf16.msra.mxu0 %v516
    %668 = vmatprep.mubr.bf16.mxu0 %v239
    %669 = vmatmul.mubr.bf16.gmra.mxu0 %v238
    %v670 = vpop.f32.mrf.mxu0
    %v671 = vadd.f32 %v250, %v670
    %v672 = vpop.f32.mrf.mxu0
    %v673 = vpop.f32.mrf.mxu0
    %v674 = vpop.f32.mrf.mxu0
    %675 = vdwg.mxu0
    %676 = vmatprep.subr.bf16.mxu0 0
    %677 = vmatpush1.bf16.msra.mxu0 %v531
    %678 = vmatprep.subr.bf16.mxu0 0
    %679 = vmatpush1.bf16.msra.mxu0 %v530
    %680 = vmatprep.subr.bf16.mxu0 0
    %681 = vmatpush1.bf16.msra.mxu0 %v529
    %682 = vmatprep.subr.bf16.mxu0 0
    %683 = vmatpush1.bf16.msra.mxu0 %v528
    %684 = vmatprep.subr.bf16.mxu0 0
    %685 = vmatpush1.bf16.msra.mxu0 %v527
    %686 = vmatprep.subr.bf16.mxu0 0
    %687 = vmatpush1.bf16.msra.mxu0 %v526
    %688 = vmatprep.subr.bf16.mxu0 0
    %689 = vmatpush1.bf16.msra.mxu0 %v525
    %690 = vmatprep.subr.bf16.mxu0 0
    %691 = vmatpush1.bf16.msra.mxu0 %v524
    %692 = vmatprep.subr.bf16.mxu0 0
    %693 = vmatpush2.bf16.msra.mxu0 %v539
    %694 = vmatprep.subr.bf16.mxu0 0
    %695 = vmatpush2.bf16.msra.mxu0 %v538
    %696 = vmatprep.subr.bf16.mxu0 0
    %697 = vmatpush2.bf16.msra.mxu0 %v537
    %698 = vmatprep.subr.bf16.mxu0 0
    %699 = vmatpush2.bf16.msra.mxu0 %v536
    %700 = vmatprep.subr.bf16.mxu0 0
    %701 = vmatpush2.bf16.msra.mxu0 %v535
    %702 = vmatprep.subr.bf16.mxu0 0
    %703 = vmatpush2.bf16.msra.mxu0 %v534
    %704 = vmatprep.subr.bf16.mxu0 0
    %705 = vmatpush2.bf16.msra.mxu0 %v533
    %706 = vmatprep.subr.bf16.mxu0 0
    %707 = vmatpush2.bf16.msra.mxu0 %v532
    %708 = vmatprep.mubr.bf16.mxu0 %v241
    %709 = vmatmul.mubr.bf16.gmra.mxu0 %v240
    %v710 = vpop.f32.mrf.mxu0
    %v711 = vadd.f32 %v671, %v710
    %v712 = vpop.f32.mrf.mxu0
    %v713 = vpop.f32.mrf.mxu0
    %v714 = vpop.f32.mrf.mxu0
    %715 = vdwg.mxu0
    %716 = vmatprep.subr.bf16.mxu0 0
    %717 = vmatpush1.bf16.msra.mxu0 %v547
    %718 = vmatprep.subr.bf16.mxu0 0
    %719 = vmatpush1.bf16.msra.mxu0 %v546
    %720 = vmatprep.subr.bf16.mxu0 0
    %721 = vmatpush1.bf16.msra.mxu0 %v545
    %722 = vmatprep.subr.bf16.mxu0 0
    %723 = vmatpush1.bf16.msra.mxu0 %v544
    %724 = vmatprep.subr.bf16.mxu0 0
    %725 = vmatpush1.bf16.msra.mxu0 %v543
    %726 = vmatprep.subr.bf16.mxu0 0
    %727 = vmatpush1.bf16.msra.mxu0 %v542
    %728 = vmatprep.subr.bf16.mxu0 0
    %729 = vmatpush1.bf16.msra.mxu0 %v541
    %730 = vmatprep.subr.bf16.mxu0 0
    %731 = vmatpush1.bf16.msra.mxu0 %v540
    %732 = vmatprep.subr.bf16.mxu0 0
    %733 = vmatpush2.bf16.msra.mxu0 %v555
    %734 = vmatprep.subr.bf16.mxu0 0
    %735 = vmatpush2.bf16.msra.mxu0 %v554
    %736 = vmatprep.subr.bf16.mxu0 0
    %737 = vmatpush2.bf16.msra.mxu0 %v553
    %738 = vmatprep.subr.bf16.mxu0 0
    %739 = vmatpush2.bf16.msra.mxu0 %v552
    %740 = vmatprep.subr.bf16.mxu0 0
    %741 = vmatpush2.bf16.msra.mxu0 %v551
    %742 = vmatprep.subr.bf16.mxu0 0
    %743 = vmatpush2.bf16.msra.mxu0 %v550
    %744 = vmatprep.subr.bf16.mxu0 0
    %745 = vmatpush2.bf16.msra.mxu0 %v549
    %746 = vmatprep.subr.bf16.mxu0 0
    %747 = vmatpush2.bf16.msra.mxu0 %v548
    %748 = vmatprep.mubr.bf16.mxu0 %v243
    %749 = vmatmul.mubr.bf16.gmra.mxu0 %v242
    %v750 = vpop.f32.mrf.mxu0
    %v751 = vadd.f32 %v711, %v750
    %v752 = vpop.f32.mrf.mxu0
    %v753 = vpop.f32.mrf.mxu0
    %v754 = vpop.f32.mrf.mxu0
    %755 = vdwg.mxu0
    %756 = vmatprep.subr.bf16.mxu0 0
    %757 = vmatpush1.bf16.msra.mxu0 %v563
    %758 = vmatprep.subr.bf16.mxu0 0
    %759 = vmatpush1.bf16.msra.mxu0 %v562
    %760 = vmatprep.subr.bf16.mxu0 0
    %761 = vmatpush1.bf16.msra.mxu0 %v561
    %762 = vmatprep.subr.bf16.mxu0 0
    %763 = vmatpush1.bf16.msra.mxu0 %v560
    %764 = vmatprep.subr.bf16.mxu0 0
    %765 = vmatpush1.bf16.msra.mxu0 %v559
    %766 = vmatprep.subr.bf16.mxu0 0
    %767 = vmatpush1.bf16.msra.mxu0 %v558
    %768 = vmatprep.subr.bf16.mxu0 0
    %769 = vmatpush1.bf16.msra.mxu0 %v557
    %770 = vmatprep.subr.bf16.mxu0 0
    %771 = vmatpush1.bf16.msra.mxu0 %v556
    %772 = vmatprep.subr.bf16.mxu0 0
    %773 = vmatpush2.bf16.msra.mxu0 %v571
    %774 = vmatprep.subr.bf16.mxu0 0
    %775 = vmatpush2.bf16.msra.mxu0 %v570
    %776 = vmatprep.subr.bf16.mxu0 0
    %777 = vmatpush2.bf16.msra.mxu0 %v569
    %778 = vmatprep.subr.bf16.mxu0 0
    %779 = vmatpush2.bf16.msra.mxu0 %v568
    %780 = vmatprep.subr.bf16.mxu0 0
    %781 = vmatpush2.bf16.msra.mxu0 %v567
    %782 = vmatprep.subr.bf16.mxu0 0
    %783 = vmatpush2.bf16.msra.mxu0 %v566
    %784 = vmatprep.subr.bf16.mxu0 0
    %785 = vmatpush2.bf16.msra.mxu0 %v565
    %786 = vmatprep.subr.bf16.mxu0 0
    %787 = vmatpush2.bf16.msra.mxu0 %v564
    %788 = vmatprep.mubr.bf16.mxu0 %v245
    %789 = vmatmul.mubr.bf16.gmra.mxu0 %v244
    %v790 = vpop.f32.mrf.mxu0
    %v791 = vadd.f32 %v751, %v790
    %v792 = vpop.f32.mrf.mxu0
    %v793 = vpop.f32.mrf.mxu0
    %v794 = vpop.f32.mrf.mxu0
    %795 = vdwg.mxu0
    %v796 = vmax.f32 %v791, 0.0
    %v797 = vpack.c.bf16 %v796, %v796
    %v799 = vlaneseq
    %v800 = vshrl.u32 %v799, 7
    %v801 = vsub.s32 0, %v800
    %v802 = vrot.slane %v191, %v801
    %v820 = vunpack.c.l.b16 %v175
    %v821 = vunpack.c.l.b16 %v176
    %v822 = vunpack.c.l.b16 %v177
    %v823 = vunpack.c.l.b16 %v178
    %v824 = vunpack.c.l.b16 %v179
    %v825 = vunpack.c.l.b16 %v180
    %v826 = vunpack.c.l.b16 %v181
    %v827 = vunpack.c.l.b16 %v182
    %v828 = vunpack.c.l.b16 %v183
    %v829 = vunpack.c.l.b16 %v184
    %v830 = vunpack.c.l.b16 %v185
    %v831 = vunpack.c.l.b16 %v186
    %v832 = vunpack.c.l.b16 %v187
    %v833 = vunpack.c.l.b16 %v188
    %v834 = vunpack.c.l.b16 %v189
    %v835 = vunpack.c.l.b16 %v190
    %v836 = vpack.c.b16 %v821, %v820
    %v837 = vpack.c.b16 %v823, %v822
    %v838 = vpack.c.b16 %v825, %v824
    %v839 = vpack.c.b16 %v827, %v826
    %v840 = vpack.c.b16 %v829, %v828
    %v841 = vpack.c.b16 %v831, %v830
    %v842 = vpack.c.b16 %v833, %v832
    %v843 = vpack.c.b16 %v835, %v834
    %852 = vmatprep.subr.bf16.mxu0 0
    %853 = vmatpush1.bf16.msra.mxu0 %v843
    %854 = vmatprep.subr.bf16.mxu0 0
    %855 = vmatpush1.bf16.msra.mxu0 %v842
    %856 = vmatprep.subr.bf16.mxu0 0
    %857 = vmatpush1.bf16.msra.mxu0 %v841
    %858 = vmatprep.subr.bf16.mxu0 0
    %859 = vmatpush1.bf16.msra.mxu0 %v840
    %860 = vmatprep.subr.bf16.mxu0 0
    %861 = vmatpush1.bf16.msra.mxu0 %v839
    %862 = vmatprep.subr.bf16.mxu0 0
    %863 = vmatpush1.bf16.msra.mxu0 %v838
    %864 = vmatprep.subr.bf16.mxu0 0
    %865 = vmatpush1.bf16.msra.mxu0 %v837
    %866 = vmatprep.subr.bf16.mxu0 0
    %867 = vmatpush1.bf16.msra.mxu0 %v836
    %868 = vmatprep.subr.bf16.mxu0 0
    %869 = vmatpush2.bf16.msra.mxu0 0
    %870 = vmatprep.subr.bf16.mxu0 0
    %871 = vmatpush2.bf16.msra.mxu0 0
    %872 = vmatprep.subr.bf16.mxu0 0
    %873 = vmatpush2.bf16.msra.mxu0 0
    %874 = vmatprep.subr.bf16.mxu0 0
    %875 = vmatpush2.bf16.msra.mxu0 0
    %876 = vmatprep.subr.bf16.mxu0 0
    %877 = vmatpush2.bf16.msra.mxu0 0
    %878 = vmatprep.subr.bf16.mxu0 0
    %879 = vmatpush2.bf16.msra.mxu0 0
    %880 = vmatprep.subr.bf16.mxu0 0
    %881 = vmatpush2.bf16.msra.mxu0 0
    %882 = vmatprep.subr.bf16.mxu0 0
    %883 = vmatpush2.bf16.msra.mxu0 0
    %884 = vmatprep.mubr.bf16.mxu0 0
    %885 = vmatmul.mubr.bf16.gmra.mxu0 %v797
    %v886 = vpop.f32.mrf.mxu0
    %v887 = vadd.f32 %v802, %v886
    %v888 = vpop.f32.mrf.mxu0
    %v889 = vpop.f32.mrf.mxu0
    %v890 = vpop.f32.mrf.mxu0
    %891 = vdwg.mxu0
    %892 = vst [vmem:[#allocation5] sm:$0x3] %v887
    %v893 = vld [vmem:[%s1] sm:$0xff]
    %v894 = vld [vmem:[%s1 + $0x8] sm:$0xff]
    %v897 = vcombine.high %v893, %v893
    %v899 = vunpack.c.l.s4 1983009808
    %v900 = vunpack.c.0.s8 %v899
    %v901 = vlaneseq
    %v902 = vshrl.u32 %v901, 7
    %v903 = vsub.s32 %v900, %v902
    %v904 = vrot.slane %v893, %v903
    %v906 = vunpack.c.l.s4 1983009808
    %v907 = vunpack.c.0.s8 %v906
    %v908 = vlaneseq
    %v909 = vshrl.u32 %v908, 7
    %v910 = vsub.s32 %v907, %v909
    %v911 = vrot.slane %v897, %v910
    %v912 = vcombine.high %v904, %v904
    %v913 = vcombine.high %v911, %v911
    %v914 = vcombine.high %v894, %v894
    %v916 = vunpack.c.l.s4 1983009808
    %v917 = vunpack.c.0.s8 %v916
    %v918 = vlaneseq
    %v919 = vshrl.u32 %v918, 7
    %v920 = vsub.s32 %v917, %v919
    %v921 = vrot.slane %v894, %v920
    %v923 = vunpack.c.l.s4 1983009808
    %v924 = vunpack.c.0.s8 %v923
    %v925 = vlaneseq
    %v926 = vshrl.u32 %v925, 7
    %v927 = vsub.s32 %v924, %v926
    %v928 = vrot.slane %v914, %v927
    %v929 = vcombine.high %v921, %v921
    %v930 = vcombine.high %v928, %v928
    %v939 = vpack.c.bf16 %v904, %v904
    %v940 = vpack.c.bf16 %v912, %v912
    %v941 = vpack.c.bf16 %v911, %v911
    %v942 = vpack.c.bf16 %v913, %v913
    %v943 = vpack.c.bf16 %v921, %v921
    %v944 = vpack.c.bf16 %v929, %v929
    %v945 = vpack.c.bf16 %v928, %v928
    %v946 = vpack.c.bf16 %v930, %v930
    %947 = vmatprep.subr.bf16.mxu0 0
    %948 = vmatpush1.bf16.msra.mxu0 %v515
    %949 = vmatprep.subr.bf16.mxu0 0
    %950 = vmatpush1.bf16.msra.mxu0 %v514
    %951 = vmatprep.subr.bf16.mxu0 0
    %952 = vmatpush1.bf16.msra.mxu0 %v513
    %953 = vmatprep.subr.bf16.mxu0 0
    %954 = vmatpush1.bf16.msra.mxu0 %v512
    %955 = vmatprep.subr.bf16.mxu0 0
    %956 = vmatpush1.bf16.msra.mxu0 %v511
    %957 = vmatprep.subr.bf16.mxu0 0
    %958 = vmatpush1.bf16.msra.mxu0 %v510
    %959 = vmatprep.subr.bf16.mxu0 0
    %960 = vmatpush1.bf16.msra.mxu0 %v509
    %961 = vmatprep.subr.bf16.mxu0 0
    %962 = vmatpush1.bf16.msra.mxu0 %v508
    %963 = vmatprep.subr.bf16.mxu0 0
    %964 = vmatpush2.bf16.msra.mxu0 %v523
    %965 = vmatprep.subr.bf16.mxu0 0
    %966 = vmatpush2.bf16.msra.mxu0 %v522
    %967 = vmatprep.subr.bf16.mxu0 0
    %968 = vmatpush2.bf16.msra.mxu0 %v521
    %969 = vmatprep.subr.bf16.mxu0 0
    %970 = vmatpush2.bf16.msra.mxu0 %v520
    %971 = vmatprep.subr.bf16.mxu0 0
    %972 = vmatpush2.bf16.msra.mxu0 %v519
    %973 = vmatprep.subr.bf16.mxu0 0
    %974 = vmatpush2.bf16.msra.mxu0 %v518
    %975 = vmatprep.subr.bf16.mxu0 0
    %976 = vmatpush2.bf16.msra.mxu0 %v517
    %977 = vmatprep.subr.bf16.mxu0 0
    %978 = vmatpush2.bf16.msra.mxu0 %v516
    %979 = vmatprep.mubr.bf16.mxu0 %v940
    %980 = vmatmul.mubr.bf16.gmra.mxu0 %v939
    %v981 = vpop.f32.mrf.mxu0
    %v982 = vadd.f32 %v250, %v981
    %v983 = vpop.f32.mrf.mxu0
    %v984 = vpop.f32.mrf.mxu0
    %v985 = vpop.f32.mrf.mxu0
    %986 = vdwg.mxu0
    %987 = vmatprep.subr.bf16.mxu0 0
    %988 = vmatpush1.bf16.msra.mxu0 %v531
    %989 = vmatprep.subr.bf16.mxu0 0
    %990 = vmatpush1.bf16.msra.mxu0 %v530
    %991 = vmatprep.subr.bf16.mxu0 0
    %992 = vmatpush1.bf16.msra.mxu0 %v529
    %993 = vmatprep.subr.bf16.mxu0 0
    %994 = vmatpush1.bf16.msra.mxu0 %v528
    %995 = vmatprep.subr.bf16.mxu0 0
    %996 = vmatpush1.bf16.msra.mxu0 %v527
    %997 = vmatprep.subr.bf16.mxu0 0
    %998 = vmatpush1.bf16.msra.mxu0 %v526
    %999 = vmatprep.subr.bf16.mxu0 0
    %1000 = vmatpush1.bf16.msra.mxu0 %v525
    %1001 = vmatprep.subr.bf16.mxu0 0
    %1002 = vmatpush1.bf16.msra.mxu0 %v524
    %1003 = vmatprep.subr.bf16.mxu0 0
    %1004 = vmatpush2.bf16.msra.mxu0 %v539
    %1005 = vmatprep.subr.bf16.mxu0 0
    %1006 = vmatpush2.bf16.msra.mxu0 %v538
    %1007 = vmatprep.subr.bf16.mxu0 0
    %1008 = vmatpush2.bf16.msra.mxu0 %v537
    %1009 = vmatprep.subr.bf16.mxu0 0
    %1010 = vmatpush2.bf16.msra.mxu0 %v536
    %1011 = vmatprep.subr.bf16.mxu0 0
    %1012 = vmatpush2.bf16.msra.mxu0 %v535
    %1013 = vmatprep.subr.bf16.mxu0 0
    %1014 = vmatpush2.bf16.msra.mxu0 %v534
    %1015 = vmatprep.subr.bf16.mxu0 0
    %1016 = vmatpush2.bf16.msra.mxu0 %v533
    %1017 = vmatprep.subr.bf16.mxu0 0
    %1018 = vmatpush2.bf16.msra.mxu0 %v532
    %1019 = vmatprep.mubr.bf16.mxu0 %v942
    %1020 = vmatmul.mubr.bf16.gmra.mxu0 %v941
    %v1021 = vpop.f32.mrf.mxu0
    %v1022 = vadd.f32 %v982, %v1021
    %v1023 = vpop.f32.mrf.mxu0
    %v1024 = vpop.f32.mrf.mxu0
    %v1025 = vpop.f32.mrf.mxu0
    %1026 = vdwg.mxu0
    %1027 = vmatprep.subr.bf16.mxu0 0
    %1028 = vmatpush1.bf16.msra.mxu0 %v547
    %1029 = vmatprep.subr.bf16.mxu0 0
    %1030 = vmatpush1.bf16.msra.mxu0 %v546
    %1031 = vmatprep.subr.bf16.mxu0 0
    %1032 = vmatpush1.bf16.msra.mxu0 %v545
    %1033 = vmatprep.subr.bf16.mxu0 0
    %1034 = vmatpush1.bf16.msra.mxu0 %v544
    %1035 = vmatprep.subr.bf16.mxu0 0
    %1036 = vmatpush1.bf16.msra.mxu0 %v543
    %1037 = vmatprep.subr.bf16.mxu0 0
    %1038 = vmatpush1.bf16.msra.mxu0 %v542
    %1039 = vmatprep.subr.bf16.mxu0 0
    %1040 = vmatpush1.bf16.msra.mxu0 %v541
    %1041 = vmatprep.subr.bf16.mxu0 0
    %1042 = vmatpush1.bf16.msra.mxu0 %v540
    %1043 = vmatprep.subr.bf16.mxu0 0
    %1044 = vmatpush2.bf16.msra.mxu0 %v555
    %1045 = vmatprep.subr.bf16.mxu0 0
    %1046 = vmatpush2.bf16.msra.mxu0 %v554
    %1047 = vmatprep.subr.bf16.mxu0 0
    %1048 = vmatpush2.bf16.msra.mxu0 %v553
    %1049 = vmatprep.subr.bf16.mxu0 0
    %1050 = vmatpush2.bf16.msra.mxu0 %v552
    %1051 = vmatprep.subr.bf16.mxu0 0
    %1052 = vmatpush2.bf16.msra.mxu0 %v551
    %1053 = vmatprep.subr.bf16.mxu0 0
    %1054 = vmatpush2.bf16.msra.mxu0 %v550
    %1055 = vmatprep.subr.bf16.mxu0 0
    %1056 = vmatpush2.bf16.msra.mxu0 %v549
    %1057 = vmatprep.subr.bf16.mxu0 0
    %1058 = vmatpush2.bf16.msra.mxu0 %v548
    %1059 = vmatprep.mubr.bf16.mxu0 %v944
    %1060 = vmatmul.mubr.bf16.gmra.mxu0 %v943
    %v1061 = vpop.f32.mrf.mxu0
    %v1062 = vadd.f32 %v1022, %v1061
    %v1063 = vpop.f32.mrf.mxu0
    %v1064 = vpop.f32.mrf.mxu0
    %v1065 = vpop.f32.mrf.mxu0
    %1066 = vdwg.mxu0
    %1067 = vmatprep.subr.bf16.mxu0 0
    %1068 = vmatpush1.bf16.msra.mxu0 %v563
    %1069 = vmatprep.subr.bf16.mxu0 0
    %1070 = vmatpush1.bf16.msra.mxu0 %v562
    %1071 = vmatprep.subr.bf16.mxu0 0
    %1072 = vmatpush1.bf16.msra.mxu0 %v561
    %1073 = vmatprep.subr.bf16.mxu0 0
    %1074 = vmatpush1.bf16.msra.mxu0 %v560
    %1075 = vmatprep.subr.bf16.mxu0 0
    %1076 = vmatpush1.bf16.msra.mxu0 %v559
    %1077 = vmatprep.subr.bf16.mxu0 0
    %1078 = vmatpush1.bf16.msra.mxu0 %v558
    %1079 = vmatprep.subr.bf16.mxu0 0
    %1080 = vmatpush1.bf16.msra.mxu0 %v557
    %1081 = vmatprep.subr.bf16.mxu0 0
    %1082 = vmatpush1.bf16.msra.mxu0 %v556
    %1083 = vmatprep.subr.bf16.mxu0 0
    %1084 = vmatpush2.bf16.msra.mxu0 %v571
    %1085 = vmatprep.subr.bf16.mxu0 0
    %1086 = vmatpush2.bf16.msra.mxu0 %v570
    %1087 = vmatprep.subr.bf16.mxu0 0
    %1088 = vmatpush2.bf16.msra.mxu0 %v569
    %1089 = vmatprep.subr.bf16.mxu0 0
    %1090 = vmatpush2.bf16.msra.mxu0 %v568
    %1091 = vmatprep.subr.bf16.mxu0 0
    %1092 = vmatpush2.bf16.msra.mxu0 %v567
    %1093 = vmatprep.subr.bf16.mxu0 0
    %1094 = vmatpush2.bf16.msra.mxu0 %v566
    %1095 = vmatprep.subr.bf16.mxu0 0
    %1096 = vmatpush2.bf16.msra.mxu0 %v565
    %1097 = vmatprep.subr.bf16.mxu0 0
    %1098 = vmatpush2.bf16.msra.mxu0 %v564
    %1099 = vmatprep.mubr.bf16.mxu0 %v946
    %1100 = vmatmul.mubr.bf16.gmra.mxu0 %v945
    %v1101 = vpop.f32.mrf.mxu0
    %v1102 = vadd.f32 %v1062, %v1101
    %v1103 = vpop.f32.mrf.mxu0
    %v1104 = vpop.f32.mrf.mxu0
    %v1105 = vpop.f32.mrf.mxu0
    %1106 = vdwg.mxu0
    %v1107 = vmax.f32 %v1102, 0.0
    %v1108 = vpack.c.bf16 %v1107, %v1107
    %1109 = vmatprep.subr.bf16.mxu0 0
    %1110 = vmatpush1.bf16.msra.mxu0 %v843
    %1111 = vmatprep.subr.bf16.mxu0 0
    %1112 = vmatpush1.bf16.msra.mxu0 %v842
    %1113 = vmatprep.subr.bf16.mxu0 0
    %1114 = vmatpush1.bf16.msra.mxu0 %v841
    %1115 = vmatprep.subr.bf16.mxu0 0
    %1116 = vmatpush1.bf16.msra.mxu0 %v840
    %1117 = vmatprep.subr.bf16.mxu0 0
    %1118 = vmatpush1.bf16.msra.mxu0 %v839
    %1119 = vmatprep.subr.bf16.mxu0 0
    %1120 = vmatpush1.bf16.msra.mxu0 %v838
    %1121 = vmatprep.subr.bf16.mxu0 0
    %1122 = vmatpush1.bf16.msra.mxu0 %v837
    %1123 = vmatprep.subr.bf16.mxu0 0
    %1124 = vmatpush1.bf16.msra.mxu0 %v836
    %1125 = vmatprep.subr.bf16.mxu0 0
    %1126 = vmatpush2.bf16.msra.mxu0 0
    %1127 = vmatprep.subr.bf16.mxu0 0
    %1128 = vmatpush2.bf16.msra.mxu0 0
    %1129 = vmatprep.subr.bf16.mxu0 0
    %1130 = vmatpush2.bf16.msra.mxu0 0
    %1131 = vmatprep.subr.bf16.mxu0 0
    %1132 = vmatpush2.bf16.msra.mxu0 0
    %1133 = vmatprep.subr.bf16.mxu0 0
    %1134 = vmatpush2.bf16.msra.mxu0 0
    %1135 = vmatprep.subr.bf16.mxu0 0
    %1136 = vmatpush2.bf16.msra.mxu0 0
    %1137 = vmatprep.subr.bf16.mxu0 0
    %1138 = vmatpush2.bf16.msra.mxu0 0
    %1139 = vmatprep.subr.bf16.mxu0 0
    %1140 = vmatpush2.bf16.msra.mxu0 0
    %1141 = vmatprep.mubr.bf16.mxu0 0
    %1142 = vmatmul.mubr.bf16.gmra.mxu0 %v1108
    %v1143 = vpop.f32.mrf.mxu0
    %v1144 = vadd.f32 %v802, %v1143
    %v1145 = vpop.f32.mrf.mxu0
    %v1146 = vpop.f32.mrf.mxu0
    %v1147 = vpop.f32.mrf.mxu0
    %1148 = vdwg.mxu0
    %1149 = vst [vmem:[#allocation6] sm:$0x3] %v1144
    %v1150 = vld [vmem:[%s2] sm:$0xff]
    %v1151 = vld [vmem:[%s2 + $0x8] sm:$0xff]
    %v1154 = vcombine.high %v1150, %v1150
    %v1156 = vunpack.c.l.s4 1983009808
    %v1157 = vunpack.c.0.s8 %v1156
    %v1158 = vlaneseq
    %v1159 = vshrl.u32 %v1158, 7
    %v1160 = vsub.s32 %v1157, %v1159
    %v1161 = vrot.slane %v1150, %v1160
    %v1163 = vunpack.c.l.s4 1983009808
    %v1164 = vunpack.c.0.s8 %v1163
    %v1165 = vlaneseq
    %v1166 = vshrl.u32 %v1165, 7
    %v1167 = vsub.s32 %v1164, %v1166
    %v1168 = vrot.slane %v1154, %v1167
    %v1169 = vcombine.high %v1161, %v1161
    %v1170 = vcombine.high %v1168, %v1168
    %v1171 = vcombine.high %v1151, %v1151
    %v1173 = vunpack.c.l.s4 1983009808
    %v1174 = vunpack.c.0.s8 %v1173
    %v1175 = vlaneseq
    %v1176 = vshrl.u32 %v1175, 7
    %v1177 = vsub.s32 %v1174, %v1176
    %v1178 = vrot.slane %v1151, %v1177
    %v1180 = vunpack.c.l.s4 1983009808
    %v1181 = vunpack.c.0.s8 %v1180
    %v1182 = vlaneseq
    %v1183 = vshrl.u32 %v1182, 7
    %v1184 = vsub.s32 %v1181, %v1183
    %v1185 = vrot.slane %v1171, %v1184
    %v1186 = vcombine.high %v1178, %v1178
    %v1187 = vcombine.high %v1185, %v1185
    %v1196 = vpack.c.bf16 %v1161, %v1161
    %v1197 = vpack.c.bf16 %v1169, %v1169
    %v1198 = vpack.c.bf16 %v1168, %v1168
    %v1199 = vpack.c.bf16 %v1170, %v1170
    %v1200 = vpack.c.bf16 %v1178, %v1178
    %v1201 = vpack.c.bf16 %v1186, %v1186
    %v1202 = vpack.c.bf16 %v1185, %v1185
    %v1203 = vpack.c.bf16 %v1187, %v1187
    %1204 = vmatprep.subr.bf16.mxu0 0
    %1205 = vmatpush1.bf16.msra.mxu0 %v515
    %1206 = vmatprep.subr.bf16.mxu0 0
    %1207 = vmatpush1.bf16.msra.mxu0 %v514
    %1208 = vmatprep.subr.bf16.mxu0 0
    %1209 = vmatpush1.bf16.msra.mxu0 %v513
    %1210 = vmatprep.subr.bf16.mxu0 0
    %1211 = vmatpush1.bf16.msra.mxu0 %v512
    %1212 = vmatprep.subr.bf16.mxu0 0
    %1213 = vmatpush1.bf16.msra.mxu0 %v511
    %1214 = vmatprep.subr.bf16.mxu0 0
    %1215 = vmatpush1.bf16.msra.mxu0 %v510
    %1216 = vmatprep.subr.bf16.mxu0 0
    %1217 = vmatpush1.bf16.msra.mxu0 %v509
    %1218 = vmatprep.subr.bf16.mxu0 0
    %1219 = vmatpush1.bf16.msra.mxu0 %v508
    %1220 = vmatprep.subr.bf16.mxu0 0
    %1221 = vmatpush2.bf16.msra.mxu0 %v523
    %1222 = vmatprep.subr.bf16.mxu0 0
    %1223 = vmatpush2.bf16.msra.mxu0 %v522
    %1224 = vmatprep.subr.bf16.mxu0 0
    %1225 = vmatpush2.bf16.msra.mxu0 %v521
    %1226 = vmatprep.subr.bf16.mxu0 0
    %1227 = vmatpush2.bf16.msra.mxu0 %v520
    %1228 = vmatprep.subr.bf16.mxu0 0
    %1229 = vmatpush2.bf16.msra.mxu0 %v519
    %1230 = vmatprep.subr.bf16.mxu0 0
    %1231 = vmatpush2.bf16.msra.mxu0 %v518
    %1232 = vmatprep.subr.bf16.mxu0 0
    %1233 = vmatpush2.bf16.msra.mxu0 %v517
    %1234 = vmatprep.subr.bf16.mxu0 0
    %1235 = vmatpush2.bf16.msra.mxu0 %v516
    %1236 = vmatprep.mubr.bf16.mxu0 %v1197
    %1237 = vmatmul.mubr.bf16.gmra.mxu0 %v1196
    %v1238 = vpop.f32.mrf.mxu0
    %v1239 = vadd.f32 %v250, %v1238
    %v1240 = vpop.f32.mrf.mxu0
    %v1241 = vpop.f32.mrf.mxu0
    %v1242 = vpop.f32.mrf.mxu0
    %1243 = vdwg.mxu0
    %1244 = vmatprep.subr.bf16.mxu0 0
    %1245 = vmatpush1.bf16.msra.mxu0 %v531
    %1246 = vmatprep.subr.bf16.mxu0 0
    %1247 = vmatpush1.bf16.msra.mxu0 %v530
    %1248 = vmatprep.subr.bf16.mxu0 0
    %1249 = vmatpush1.bf16.msra.mxu0 %v529
    %1250 = vmatprep.subr.bf16.mxu0 0
    %1251 = vmatpush1.bf16.msra.mxu0 %v528
    %1252 = vmatprep.subr.bf16.mxu0 0
    %1253 = vmatpush1.bf16.msra.mxu0 %v527
    %1254 = vmatprep.subr.bf16.mxu0 0
    %1255 = vmatpush1.bf16.msra.mxu0 %v526
    %1256 = vmatprep.subr.bf16.mxu0 0
    %1257 = vmatpush1.bf16.msra.mxu0 %v525
    %1258 = vmatprep.subr.bf16.mxu0 0
    %1259 = vmatpush1.bf16.msra.mxu0 %v524
    %1260 = vmatprep.subr.bf16.mxu0 0
    %1261 = vmatpush2.bf16.msra.mxu0 %v539
    %1262 = vmatprep.subr.bf16.mxu0 0
    %1263 = vmatpush2.bf16.msra.mxu0 %v538
    %1264 = vmatprep.subr.bf16.mxu0 0
    %1265 = vmatpush2.bf16.msra.mxu0 %v537
    %1266 = vmatprep.subr.bf16.mxu0 0
    %1267 = vmatpush2.bf16.msra.mxu0 %v536
    %1268 = vmatprep.subr.bf16.mxu0 0
    %1269 = vmatpush2.bf16.msra.mxu0 %v535
    %1270 = vmatprep.subr.bf16.mxu0 0
    %1271 = vmatpush2.bf16.msra.mxu0 %v534
    %1272 = vmatprep.subr.bf16.mxu0 0
    %1273 = vmatpush2.bf16.msra.mxu0 %v533
    %1274 = vmatprep.subr.bf16.mxu0 0
    %1275 = vmatpush2.bf16.msra.mxu0 %v532
    %1276 = vmatprep.mubr.bf16.mxu0 %v1199
    %1277 = vmatmul.mubr.bf16.gmra.mxu0 %v1198
    %v1278 = vpop.f32.mrf.mxu0
    %v1279 = vadd.f32 %v1239, %v1278
    %v1280 = vpop.f32.mrf.mxu0
    %v1281 = vpop.f32.mrf.mxu0
    %v1282 = vpop.f32.mrf.mxu0
    %1283 = vdwg.mxu0
    %1284 = vmatprep.subr.bf16.mxu0 0
    %1285 = vmatpush1.bf16.msra.mxu0 %v547
    %1286 = vmatprep.subr.bf16.mxu0 0
    %1287 = vmatpush1.bf16.msra.mxu0 %v546
    %1288 = vmatprep.subr.bf16.mxu0 0
    %1289 = vmatpush1.bf16.msra.mxu0 %v545
    %1290 = vmatprep.subr.bf16.mxu0 0
    %1291 = vmatpush1.bf16.msra.mxu0 %v544
    %1292 = vmatprep.subr.bf16.mxu0 0
    %1293 = vmatpush1.bf16.msra.mxu0 %v543
    %1294 = vmatprep.subr.bf16.mxu0 0
    %1295 = vmatpush1.bf16.msra.mxu0 %v542
    %1296 = vmatprep.subr.bf16.mxu0 0
    %1297 = vmatpush1.bf16.msra.mxu0 %v541
    %1298 = vmatprep.subr.bf16.mxu0 0
    %1299 = vmatpush1.bf16.msra.mxu0 %v540
    %1300 = vmatprep.subr.bf16.mxu0 0
    %1301 = vmatpush2.bf16.msra.mxu0 %v555
    %1302 = vmatprep.subr.bf16.mxu0 0
    %1303 = vmatpush2.bf16.msra.mxu0 %v554
    %1304 = vmatprep.subr.bf16.mxu0 0
    %1305 = vmatpush2.bf16.msra.mxu0 %v553
    %1306 = vmatprep.subr.bf16.mxu0 0
    %1307 = vmatpush2.bf16.msra.mxu0 %v552
    %1308 = vmatprep.subr.bf16.mxu0 0
    %1309 = vmatpush2.bf16.msra.mxu0 %v551
    %1310 = vmatprep.subr.bf16.mxu0 0
    %1311 = vmatpush2.bf16.msra.mxu0 %v550
    %1312 = vmatprep.subr.bf16.mxu0 0
    %1313 = vmatpush2.bf16.msra.mxu0 %v549
    %1314 = vmatprep.subr.bf16.mxu0 0
    %1315 = vmatpush2.bf16.msra.mxu0 %v548
    %1316 = vmatprep.mubr.bf16.mxu0 %v1201
    %1317 = vmatmul.mubr.bf16.gmra.mxu0 %v1200
    %v1318 = vpop.f32.mrf.mxu0
    %v1319 = vadd.f32 %v1279, %v1318
    %v1320 = vpop.f32.mrf.mxu0
    %v1321 = vpop.f32.mrf.mxu0
    %v1322 = vpop.f32.mrf.mxu0
    %1323 = vdwg.mxu0
    %1324 = vmatprep.subr.bf16.mxu0 0
    %1325 = vmatpush1.bf16.msra.mxu0 %v563
    %1326 = vmatprep.subr.bf16.mxu0 0
    %1327 = vmatpush1.bf16.msra.mxu0 %v562
    %1328 = vmatprep.subr.bf16.mxu0 0
    %1329 = vmatpush1.bf16.msra.mxu0 %v561
    %1330 = vmatprep.subr.bf16.mxu0 0
    %1331 = vmatpush1.bf16.msra.mxu0 %v560
    %1332 = vmatprep.subr.bf16.mxu0 0
    %1333 = vmatpush1.bf16.msra.mxu0 %v559
    %1334 = vmatprep.subr.bf16.mxu0 0
    %1335 = vmatpush1.bf16.msra.mxu0 %v558
    %1336 = vmatprep.subr.bf16.mxu0 0
    %1337 = vmatpush1.bf16.msra.mxu0 %v557
    %1338 = vmatprep.subr.bf16.mxu0 0
    %1339 = vmatpush1.bf16.msra.mxu0 %v556
    %1340 = vmatprep.subr.bf16.mxu0 0
    %1341 = vmatpush2.bf16.msra.mxu0 %v571
    %1342 = vmatprep.subr.bf16.mxu0 0
    %1343 = vmatpush2.bf16.msra.mxu0 %v570
    %1344 = vmatprep.subr.bf16.mxu0 0
    %1345 = vmatpush2.bf16.msra.mxu0 %v569
    %1346 = vmatprep.subr.bf16.mxu0 0
    %1347 = vmatpush2.bf16.msra.mxu0 %v568
    %1348 = vmatprep.subr.bf16.mxu0 0
    %1349 = vmatpush2.bf16.msra.mxu0 %v567
    %1350 = vmatprep.subr.bf16.mxu0 0
    %1351 = vmatpush2.bf16.msra.mxu0 %v566
    %1352 = vmatprep.subr.bf16.mxu0 0
    %1353 = vmatpush2.bf16.msra.mxu0 %v565
    %1354 = vmatprep.subr.bf16.mxu0 0
    %1355 = vmatpush2.bf16.msra.mxu0 %v564
    %1356 = vmatprep.mubr.bf16.mxu0 %v1203
    %1357 = vmatmul.mubr.bf16.gmra.mxu0 %v1202
    %v1358 = vpop.f32.mrf.mxu0
    %v1359 = vadd.f32 %v1319, %v1358
    %v1360 = vpop.f32.mrf.mxu0
    %v1361 = vpop.f32.mrf.mxu0
    %v1362 = vpop.f32.mrf.mxu0
    %1363 = vdwg.mxu0
    %v1364 = vmax.f32 %v1359, 0.0
    %v1365 = vpack.c.bf16 %v1364, %v1364
    %1366 = vmatprep.subr.bf16.mxu0 0
    %1367 = vmatpush1.bf16.msra.mxu0 %v843
    %1368 = vmatprep.subr.bf16.mxu0 0
    %1369 = vmatpush1.bf16.msra.mxu0 %v842
    %1370 = vmatprep.subr.bf16.mxu0 0
    %1371 = vmatpush1.bf16.msra.mxu0 %v841
    %1372 = vmatprep.subr.bf16.mxu0 0
    %1373 = vmatpush1.bf16.msra.mxu0 %v840
    %1374 = vmatprep.subr.bf16.mxu0 0
    %1375 = vmatpush1.bf16.msra.mxu0 %v839
    %1376 = vmatprep.subr.bf16.mxu0 0
    %1377 = vmatpush1.bf16.msra.mxu0 %v838
    %1378 = vmatprep.subr.bf16.mxu0 0
    %1379 = vmatpush1.bf16.msra.mxu0 %v837
    %1380 = vmatprep.subr.bf16.mxu0 0
    %1381 = vmatpush1.bf16.msra.mxu0 %v836
    %1382 = vmatprep.subr.bf16.mxu0 0
    %1383 = vmatpush2.bf16.msra.mxu0 0
    %1384 = vmatprep.subr.bf16.mxu0 0
    %1385 = vmatpush2.bf16.msra.mxu0 0
    %1386 = vmatprep.subr.bf16.mxu0 0
    %1387 = vmatpush2.bf16.msra.mxu0 0
    %1388 = vmatprep.subr.bf16.mxu0 0
    %1389 = vmatpush2.bf16.msra.mxu0 0
    %1390 = vmatprep.subr.bf16.mxu0 0
    %1391 = vmatpush2.bf16.msra.mxu0 0
    %1392 = vmatprep.subr.bf16.mxu0 0
    %1393 = vmatpush2.bf16.msra.mxu0 0
    %1394 = vmatprep.subr.bf16.mxu0 0
    %1395 = vmatpush2.bf16.msra.mxu0 0
    %1396 = vmatprep.subr.bf16.mxu0 0
    %1397 = vmatpush2.bf16.msra.mxu0 0
    %1398 = vmatprep.mubr.bf16.mxu0 0
    %1399 = vmatmul.mubr.bf16.gmra.mxu0 %v1365
    %v1400 = vpop.f32.mrf.mxu0
    %v1401 = vadd.f32 %v802, %v1400
    %v1402 = vpop.f32.mrf.mxu0
    %v1403 = vpop.f32.mrf.mxu0
    %v1404 = vpop.f32.mrf.mxu0
    %1405 = vdwg.mxu0
    %1406 = vst [vmem:[#allocation8] sm:$0x3] %v1401
    // Predicated region
    $region34: #{_triplet_apply.1} parent=1 // pred_check
      _
    $region35: #{_triplet_apply.1} parent=1 // pred_check_branch
      %1408 = sbr.rel (0) target = $region37
    $region36: #{_triplet_apply.1} parent=1 // pred_region
      %s1410 = ssub.s32 32, 32
      %1411 = vsyncadd [#allocation4], %s1410
      %s1413 = sshll.u32 [#allocation5], 4
      %s1414 = int_to_ptr.vmem [resolvable:$true] %s1413
      %1416 = dma.vmem_to_hbm [thread:$0]  %s1414, 32, %s7, [#allocation4]
    $region37: #{_triplet_apply.1} parent=1 // pred_fallthru
      _
    // Predicated region
    $region38: #{_triplet_apply.1} parent=1 // pred_check
      _
    $region39: #{_triplet_apply.1} parent=1 // pred_check_branch
      %1418 = sbr.rel (0) target = $region41
    $region40: #{_triplet_apply.1} parent=1 // pred_region
      %s1420 = ssub.s32 32, 32
      %1421 = vsyncadd [#allocation7], %s1420
      %s1423 = sshll.u32 [#allocation6], 4
      %s1424 = int_to_ptr.vmem [resolvable:$true] %s1423
      %1426 = dma.vmem_to_hbm [thread:$0]  %s1424, 32, %s8, [#allocation7]
    $region41: #{_triplet_apply.1} parent=1 // pred_fallthru
      _
    // Predicated region
    $region42: #{_triplet_apply.1} parent=1 // pred_check
      _
    $region43: #{_triplet_apply.1} parent=1 // pred_check_branch
      %1428 = sbr.rel (0) target = $region45
    $region44: #{_triplet_apply.1} parent=1 // pred_region
      %s1430 = ssub.s32 32, 32
      %1431 = vsyncadd [#allocation7], %s1430
      %s1433 = sshll.u32 [#allocation8], 4
      %s1434 = int_to_ptr.vmem [resolvable:$true] %s1433
      %1436 = dma.vmem_to_hbm [thread:$0]  %s1434, 32, %s9, [#allocation7]
    $region45: #{_triplet_apply.1} parent=1 // pred_fallthru
      _
    // Predicated region
    $region46: #{_triplet_apply.1} parent=1 // pred_check
      _
    $region47: #{_triplet_apply.1} parent=1 // pred_check_branch
      %1438 = sbr.rel (0) target = $region49
    $region48: #{_triplet_apply.1} parent=1 // pred_region
      %1439 = dma.done [#allocation4], 32
    $region49: #{_triplet_apply.1} parent=1 // pred_fallthru
      _
    // Predicated region
    $region50: #{_triplet_apply.1} parent=1 // pred_check
      _
    $region51: #{_triplet_apply.1} parent=1 // pred_check_branch
      %1441 = sbr.rel (0) target = $region53
    $region52: #{_triplet_apply.1} parent=1 // pred_region
      %1442 = dma.done [#allocation7], 32
    $region53: #{_triplet_apply.1} parent=1 // pred_fallthru
      _
    // Predicated region
    $region54: #{_triplet_apply.1} parent=1 // pred_check
      _
    $region55: #{_triplet_apply.1} parent=1 // pred_check_branch
      %1444 = sbr.rel (0) target = $region57
    $region56: #{_triplet_apply.1} parent=1 // pred_region
      %1445 = dma.done [#allocation7], 32
    $region57: #{_triplet_apply.1} parent=1 // pred_fallthru
      _
    %1446 = vsyncpa [#allocation3], 1
    %1447 = vsyncpa [#allocation4], 1
    %1448 = vsyncpa [#allocation7], 1

</llo_original>
